<compile_context>
chip_gen: v5e
topology: v5e:2x2
jax: 0.10.0
libtpu: 0.0.40
codegen_flags: <defaults>
</compile_context>

<pallas_src>
import math
from functools import partial

import jax
import jax.numpy as jnp
from jax.experimental import pallas as pl
from jax.experimental.pallas import tpu as pltpu

# ---- module hyperparameters (Block(dim=32, num_heads=4), mlp_ratio=4.0) ----
DIM = 32
NUM_HEADS = 4
HEAD_DIM = DIM // NUM_HEADS
MLP_HIDDEN = int(DIM * 4.0)
LN_EPS = 1e-5                    # nn.LayerNorm default
SCALE = HEAD_DIM ** (-0.5)


def _layernorm(x, w, b):
    mean = jnp.mean(x, axis=-1, keepdims=True)
    var = jnp.mean((x - mean) ** 2, axis=-1, keepdims=True)
    return (x - mean) * jax.lax.rsqrt(var + LN_EPS) * w + b


def _gelu_exact(x):
    # nn.GELU default is the exact erf formulation
    return 0.5 * x * (1.0 + jax.lax.erf(x * (1.0 / math.sqrt(2.0))))


def _block_kernel(x_ref,
                  ln1w_ref, ln1b_ref,
                  wq_ref, wk_ref, wv_ref,
                  wproj_ref, bproj_ref,
                  ln2w_ref, ln2b_ref,
                  w1_ref, b1_ref, w2_ref, b2_ref,
                  o_ref,
                  *, bt, n, c, nh, hd):
    rows = bt * n
    xf = x_ref[...]                                       # (rows, C): bt batches x N tokens

    # ---------------- attention branch ----------------
    xn = _layernorm(xf, ln1w_ref[...], ln1b_ref[...])

    # Three lane-aligned QKV dots (qkv_bias=False). The attention scale is
    # pre-folded into Wq by the wrapper, so no per-element scaling here.
    q = jnp.dot(xn, wq_ref[...], preferred_element_type=jnp.float32).reshape(bt, n, c)
    k = jnp.dot(xn, wk_ref[...], preferred_element_type=jnp.float32).reshape(bt, n, c)
    v = jnp.dot(xn, wv_ref[...], preferred_element_type=jnp.float32).reshape(bt, n, c)

    # Fold heads into the leading batch axis: (nh*bt, N, hd). Leading-axis
    # concatenation of static lane slices; no 4-D dot_general / mid-dim
    # transposes are needed downstream.
    def heads_to_batch(t):
        return jnp.concatenate([t[:, :, h * hd:(h + 1) * hd] for h in range(nh)],
                               axis=0)

    qz = heads_to_batch(q)                                # (nh*bt, N, hd)
    kz = heads_to_batch(k)
    vz = heads_to_batch(v)

    # Single batched score / softmax / AV chain over (heads x batches).
    s = jnp.einsum('znd,zmd->znm', qz, kz,
                   preferred_element_type=jnp.float32)    # (nh*bt, N, N), scale already in q
    s = s - jnp.max(s, axis=-1, keepdims=True)
    p = jnp.exp(s)
    p = p * pl.reciprocal(jnp.sum(p, axis=-1, keepdims=True), approx=True)
    oz = jnp.einsum('znm,zmd->znd', p, vz,
                    preferred_element_type=jnp.float32)   # (nh*bt, N, hd)

    # Reassemble (rows, C) with one lane-axis concat, then a single full-width
    # (rows, C) @ (C, C) output projection (replaces 4 K=8 per-head dots).
    o_cat = jnp.concatenate([oz[h * bt:(h + 1) * bt] for h in range(nh)],
                            axis=-1)                      # (bt, N, C)
    attn_proj = jnp.dot(o_cat.reshape(rows, c), wproj_ref[...],
                        preferred_element_type=jnp.float32)

    x1 = xf + attn_proj + bproj_ref[...]                  # residual 1 (drop_path = Identity)

    # ---------------- MLP branch ----------------
    xn2 = _layernorm(x1, ln2w_ref[...], ln2b_ref[...])
    h1 = jnp.dot(xn2, w1_ref[...], preferred_element_type=jnp.float32) + b1_ref[...]
    h1 = _gelu_exact(h1)
    h2 = jnp.dot(h1, w2_ref[...], preferred_element_type=jnp.float32) + b2_ref[...]

    # C=32 (<128 lanes) so stores are masked vst.msk; lane-dense I/O relayout is
    # only worth it if profiling shows stores as the binding slot — left as is.
    o_ref[...] = x1 + h2                                  # residual 2


def _choose_bt(B, N, target_rows=1024):
    """Pick batches-per-grid-step.

    Goals (per perf review):
      * rows = bt*N as large as possible up to ~target_rows (fewer grid steps,
        more MXU rows per push), while rows stays a multiple of 8.
      * bt <= B//2 whenever B >= 2 so v7x's 2 TensorCores both get parallel
        grid steps (costs nothing on 1-TC v5e/v6e).
    """
    if N % 8 != 0:
        # TODO(synk): pad the token dim to a multiple of 8; until then use a
        # single full-array block (block_shape == array shape sidesteps the
        # (8,128) divisibility rule).
        return B
    cap = B // 2 if B >= 2 else B
    cands = [bt for bt in range(1, cap + 1) if B % bt == 0]
    if not cands:
        return B
    fitting = [bt for bt in cands if bt * N <= target_rows]
    return max(fitting) if fitting else min(cands)


def prepare_block_params(params):
    """One-time host-side parameter preprocessing (hoisted out of the forward).

    Folds the attention scale into Wq so the kernel never multiplies by it.
    """
    (ln1w, ln1b, wq_t, wk_t, wv_t, wp_t, bproj,
     ln2w, ln2b, w1_t, b1, w2_t, b2) = params
    return (ln1w, ln1b, wq_t * SCALE, wk_t, wv_t, wp_t, bproj,
            ln2w, ln2b, w1_t, b1, w2_t, b2)


def block_forward(x, prepared_params):
    B, N, C = x.shape
    (ln1w, ln1b, wq_t, wk_t, wv_t, wp_t, bproj,
     ln2w, ln2b, w1_t, b1, w2_t, b2) = prepared_params
    hidden = w1_t.shape[1]

    bt = _choose_bt(B, N)
    rows = bt * N
    steps = B // bt

    # Explicit VMEM budget: ~4 KB/row of live f32 intermediates plus weights /
    # double-buffered I-O headroom; floored at the 32 MiB default scope and
    # capped at 48 MiB so the tile never exceeds v7x's 64 MiB physical VMEM.
    est_vmem = rows * 4 * 1024 + (4 << 20)
    vmem_limit = int(min(max(est_vmem, 32 << 20), 48 << 20))

    x_flat = x.reshape(B * N, C)
    kernel = partial(_block_kernel, bt=bt, n=N, c=C, nh=NUM_HEADS, hd=HEAD_DIM)

    def const_spec(shape):
        # Same weight block reused by every grid step (stays resident in VMEM).
        return pl.BlockSpec(shape, lambda i: (0, 0))

    out = pl.pallas_call(
        kernel,
        out_shape=jax.ShapeDtypeStruct((B * N, C), jnp.float32),
        grid=(steps,),
        in_specs=[
            pl.BlockSpec((rows, C), lambda i: (i, 0)),          # x (flattened tokens)
            const_spec((1, C)), const_spec((1, C)),             # ln1 w, b
            const_spec((C, C)),                                 # Wq^T (scale pre-folded)
            const_spec((C, C)),                                 # Wk^T
            const_spec((C, C)),                                 # Wv^T
            const_spec((C, C)), const_spec((1, C)),             # Wproj^T, bproj
            const_spec((1, C)), const_spec((1, C)),             # ln2 w, b
            const_spec((C, hidden)), const_spec((1, hidden)),   # W1^T, b1
            const_spec((hidden, C)), const_spec((1, C)),        # W2^T, b2
        ],
        out_specs=pl.BlockSpec((rows, C), lambda i: (i, 0)),
        compiler_params=pltpu.CompilerParams(
            dimension_semantics=("parallel",),
            vmem_limit_bytes=vmem_limit),
    )(x_flat, ln1w, ln1b, wq_t, wk_t, wv_t, wp_t, bproj,
      ln2w, ln2b, w1_t, b1, w2_t, b2)
    return out.reshape(B, N, C)


# ---------------- pure-JAX reference (mirrors the PyTorch forward) ----------------
def block_reference(x, p):
    (ln1w, ln1b, wq_t, wk_t, wv_t, wp_t, bp,
     ln2w, ln2b, w1_t, b1, w2_t, b2) = p
    B, N, C = x.shape

    def ln(z, w, b):
        m = jnp.mean(z, -1, keepdims=True)
        v = jnp.mean((z - m) ** 2, -1, keepdims=True)
        return (z - m) / jnp.sqrt(v + LN_EPS) * w + b

    xn = ln(x, ln1w[0], ln1b[0])
    q = (xn @ wq_t).reshape(B, N, NUM_HEADS, HEAD_DIM).transpose(0, 2, 1, 3)
    k = (xn @ wk_t).reshape(B, N, NUM_HEADS, HEAD_DIM).transpose(0, 2, 1, 3)
    v = (xn @ wv_t).reshape(B, N, NUM_HEADS, HEAD_DIM).transpose(0, 2, 1, 3)
    attn = jnp.einsum('bhnd,bhmd->bhnm', q, k) * SCALE
    attn = jax.nn.softmax(attn, axis=-1)
    o = jnp.einsum('bhnm,bhmd->bhnd', attn, v).transpose(0, 2, 1, 3).reshape(B, N, C)
    o = o @ wp_t + bp[0]
    x = x + o
    xn2 = ln(x, ln2w[0], ln2b[0])
    h = xn2 @ w1_t + b1[0]
    h = 0.5 * h * (1.0 + jax.lax.erf(h / jnp.sqrt(2.0)))
    h = h @ w2_t + b2[0]
    return x + h


def init_params(key):
    ks = jax.random.split(key, 8)
    C, H = DIM, MLP_HIDDEN
    # torch layouts: qkv (3C, C), proj (C, C), fc1 (H, C), fc2 (C, H)
    wqkv = 0.02 * jax.random.normal(ks[0], (3 * C, C), jnp.float32)
    wproj = 0.02 * jax.random.normal(ks[1], (C, C), jnp.float32)
    bproj = 0.02 * jax.random.normal(ks[2], (1, C), jnp.float32)
    w1 = 0.02 * jax.random.normal(ks[3], (H, C), jnp.float32)
    b1 = 0.02 * jax.random.normal(ks[4], (1, H), jnp.float32)
    w2 = 0.02 * jax.random.normal(ks[5], (C, H), jnp.float32)
    b2 = 0.02 * jax.random.normal(ks[6], (1, C), jnp.float32)
    ln1w = jnp.ones((1, C), jnp.float32) + 0.1 * jax.random.normal(ks[7], (1, C), jnp.float32)
    ln1b = jnp.full((1, C), 0.05, jnp.float32)
    ln2w = jnp.ones((1, C), jnp.float32) - 0.03
    ln2b = jnp.full((1, C), -0.02, jnp.float32)

    wq_t = wqkv[0 * C:1 * C, :].T        # (in, out) layout for the kernel
    wk_t = wqkv[1 * C:2 * C, :].T
    wv_t = wqkv[2 * C:3 * C, :].T
    wp_t = wproj.T
    w1_t = w1.T
    w2_t = w2.T
    return (ln1w, ln1b, wq_t, wk_t, wv_t, wp_t, bproj,
            ln2w, ln2b, w1_t, b1, w2_t, b2)


if __name__ == "__main__":
    key = jax.random.PRNGKey(0)
    kx, kp = jax.random.split(key)
    B, N = 2, 8
    x = jax.random.normal(kx, (B, N, DIM), jnp.float32)

    params = init_params(kp)                       # raw (reference) parameters
    kernel_params = prepare_block_params(params)   # one-time kernel preprocessing

    out = block_forward(x, kernel_params)
    out = jax.block_until_ready(out)

    ref = block_reference(x, params)
    assert out.shape == (B, N, DIM)
    # Slightly looser than strict-f32: approx EUP reciprocal in the softmax and
    # batched/fused f32 summation-order differences; math is otherwise identical.
    assert jnp.allclose(out, ref, rtol=1e-3, atol=1e-3), \
        f"max abs diff {jnp.max(jnp.abs(out - ref))}"
    print("KERNEL_OK")
</pallas_src>

<mosaic_0001>
module attributes {stable_mosaic.version = 11 : i64} {
  func.func @_block_kernel(%arg0: i32, %arg1: memref<8x32xf32, #tpu.memory_space<vmem>>, %arg2: memref<1x32xf32, #tpu.memory_space<vmem>>, %arg3: memref<1x32xf32, #tpu.memory_space<vmem>>, %arg4: memref<32x32xf32, #tpu.memory_space<vmem>>, %arg5: memref<32x32xf32, #tpu.memory_space<vmem>>, %arg6: memref<32x32xf32, #tpu.memory_space<vmem>>, %arg7: memref<32x32xf32, #tpu.memory_space<vmem>>, %arg8: memref<1x32xf32, #tpu.memory_space<vmem>>, %arg9: memref<1x32xf32, #tpu.memory_space<vmem>>, %arg10: memref<1x32xf32, #tpu.memory_space<vmem>>, %arg11: memref<32x128xf32, #tpu.memory_space<vmem>>, %arg12: memref<1x128xf32, #tpu.memory_space<vmem>>, %arg13: memref<128x32xf32, #tpu.memory_space<vmem>>, %arg14: memref<1x32xf32, #tpu.memory_space<vmem>>, %arg15: memref<8x32xf32, #tpu.memory_space<vmem>>) attributes {dimension_semantics = [#tpu.dimension_semantics<parallel>], iteration_bounds = array<i64: 2>, scalar_prefetch = 0 : i64, scratch_operands = 0 : i64, tpu.core_type = #tpu.core_type<tc>, window_params = [{transform_indices = @transform_0, window_bounds = array<i64: 8, 32>}, {pipeline_mode = #tpu.pipeline_mode<synchronous>, transform_indices = @transform_1, window_bounds = array<i64: 1, 32>}, {pipeline_mode = #tpu.pipeline_mode<synchronous>, transform_indices = @transform_2, window_bounds = array<i64: 1, 32>}, {pipeline_mode = #tpu.pipeline_mode<synchronous>, transform_indices = @transform_3, window_bounds = array<i64: 32, 32>}, {pipeline_mode = #tpu.pipeline_mode<synchronous>, transform_indices = @transform_4, window_bounds = array<i64: 32, 32>}, {pipeline_mode = #tpu.pipeline_mode<synchronous>, transform_indices = @transform_5, window_bounds = array<i64: 32, 32>}, {pipeline_mode = #tpu.pipeline_mode<synchronous>, transform_indices = @transform_6, window_bounds = array<i64: 32, 32>}, {pipeline_mode = #tpu.pipeline_mode<synchronous>, transform_indices = @transform_7, window_bounds = array<i64: 1, 32>}, {pipeline_mode = #tpu.pipeline_mode<synchronous>, transform_indices = @transform_8, window_bounds = array<i64: 1, 32>}, {pipeline_mode = #tpu.pipeline_mode<synchronous>, transform_indices = @transform_9, window_bounds = array<i64: 1, 32>}, {pipeline_mode = #tpu.pipeline_mode<synchronous>, transform_indices = @transform_10, window_bounds = array<i64: 32, 128>}, {pipeline_mode = #tpu.pipeline_mode<synchronous>, transform_indices = @transform_11, window_bounds = array<i64: 1, 128>}, {pipeline_mode = #tpu.pipeline_mode<synchronous>, transform_indices = @transform_12, window_bounds = array<i64: 128, 32>}, {pipeline_mode = #tpu.pipeline_mode<synchronous>, transform_indices = @transform_13, window_bounds = array<i64: 1, 32>}, {transform_indices = @transform_14, window_bounds = array<i64: 8, 32>}]} {
    %c0 = arith.constant 0 : index
    %c0_0 = arith.constant 0 : index
    %0 = vector.load %arg1[%c0, %c0_0] : memref<8x32xf32, #tpu.memory_space<vmem>>, vector<8x32xf32>
    %c0_1 = arith.constant 0 : index
    %c0_2 = arith.constant 0 : index
    %1 = vector.load %arg2[%c0_1, %c0_2] : memref<1x32xf32, #tpu.memory_space<vmem>>, vector<1x32xf32>
    %c0_3 = arith.constant 0 : index
    %c0_4 = arith.constant 0 : index
    %2 = vector.load %arg3[%c0_3, %c0_4] : memref<1x32xf32, #tpu.memory_space<vmem>>, vector<1x32xf32>
    %cst = arith.constant dense<0.000000e+00> : vector<8xf32>
    %3 = vector.multi_reduction <add>, %0, %cst [1] : vector<8x32xf32> to vector<8xf32>
    %4 = vector.shape_cast %3 : vector<8xf32> to vector<8x1xf32>
    %cst_5 = arith.constant 3.200000e+01 : f32
    %5 = vector.broadcast %cst_5 : f32 to vector<8x1xf32>
    %6 = arith.divf %4, %5 : vector<8x1xf32>
    %7 = vector.broadcast %6 : vector<8x1xf32> to vector<8x32xf32>
    %8 = arith.subf %0, %7 : vector<8x32xf32>
    %9 = arith.mulf %8, %8 : vector<8x32xf32>
    %cst_6 = arith.constant dense<0.000000e+00> : vector<8xf32>
    %10 = vector.multi_reduction <add>, %9, %cst_6 [1] : vector<8x32xf32> to vector<8xf32>
    %11 = vector.shape_cast %10 : vector<8xf32> to vector<8x1xf32>
    %cst_7 = arith.constant 3.200000e+01 : f32
    %12 = vector.broadcast %cst_7 : f32 to vector<8x1xf32>
    %13 = arith.divf %11, %12 : vector<8x1xf32>
    %14 = vector.broadcast %6 : vector<8x1xf32> to vector<8x32xf32>
    %15 = arith.subf %0, %14 : vector<8x32xf32>
    %cst_8 = arith.constant 9.99999974E-6 : f32
    %16 = vector.broadcast %cst_8 : f32 to vector<8x1xf32>
    %17 = arith.addf %13, %16 : vector<8x1xf32>
    %18 = math.rsqrt %17 : vector<8x1xf32>
    %19 = vector.broadcast %18 : vector<8x1xf32> to vector<8x32xf32>
    %20 = arith.mulf %15, %19 : vector<8x32xf32>
    %21 = vector.broadcast %1 : vector<1x32xf32> to vector<8x32xf32>
    %22 = arith.mulf %20, %21 : vector<8x32xf32>
    %23 = vector.broadcast %2 : vector<1x32xf32> to vector<8x32xf32>
    %24 = arith.addf %22, %23 : vector<8x32xf32>
    %c0_9 = arith.constant 0 : index
    %c0_10 = arith.constant 0 : index
    %25 = vector.load %arg4[%c0_9, %c0_10] : memref<32x32xf32, #tpu.memory_space<vmem>>, vector<32x32xf32>
    %cst_11 = arith.constant dense<0.000000e+00> : vector<8x32xf32>
    %26 = tpu.matmul %24, %25, %cst_11 {dimension_numbers = #tpu.dot_dimension_numbers<[1], [0], [0], [1], [0, 0, 1, 1], [], []>} : vector<8x32xf32>, vector<32x32xf32>, vector<8x32xf32> -> vector<8x32xf32>
    %27 = vector.shape_cast %26 : vector<8x32xf32> to vector<1x8x32xf32>
    %c0_12 = arith.constant 0 : index
    %c0_13 = arith.constant 0 : index
    %28 = vector.load %arg5[%c0_12, %c0_13] : memref<32x32xf32, #tpu.memory_space<vmem>>, vector<32x32xf32>
    %cst_14 = arith.constant dense<0.000000e+00> : vector<8x32xf32>
    %29 = tpu.matmul %24, %28, %cst_14 {dimension_numbers = #tpu.dot_dimension_numbers<[1], [0], [0], [1], [0, 0, 1, 1], [], []>} : vector<8x32xf32>, vector<32x32xf32>, vector<8x32xf32> -> vector<8x32xf32>
    %30 = vector.shape_cast %29 : vector<8x32xf32> to vector<1x8x32xf32>
    %c0_15 = arith.constant 0 : index
    %c0_16 = arith.constant 0 : index
    %31 = vector.load %arg6[%c0_15, %c0_16] : memref<32x32xf32, #tpu.memory_space<vmem>>, vector<32x32xf32>
    %cst_17 = arith.constant dense<0.000000e+00> : vector<8x32xf32>
    %32 = tpu.matmul %24, %31, %cst_17 {dimension_numbers = #tpu.dot_dimension_numbers<[1], [0], [0], [1], [0, 0, 1, 1], [], []>} : vector<8x32xf32>, vector<32x32xf32>, vector<8x32xf32> -> vector<8x32xf32>
    %33 = vector.shape_cast %32 : vector<8x32xf32> to vector<1x8x32xf32>
    %34 = vector.extract_strided_slice %27 {offsets = [0, 0, 0], sizes = [1, 8, 8], strides = [1, 1, 1]} : vector<1x8x32xf32> to vector<1x8x8xf32>
    %35 = vector.extract_strided_slice %27 {offsets = [0, 0, 8], sizes = [1, 8, 8], strides = [1, 1, 1]} : vector<1x8x32xf32> to vector<1x8x8xf32>
    %36 = vector.extract_strided_slice %27 {offsets = [0, 0, 16], sizes = [1, 8, 8], strides = [1, 1, 1]} : vector<1x8x32xf32> to vector<1x8x8xf32>
    %37 = vector.extract_strided_slice %27 {offsets = [0, 0, 24], sizes = [1, 8, 8], strides = [1, 1, 1]} : vector<1x8x32xf32> to vector<1x8x8xf32>
    %38 = tpu.concatenate %34, %35, %36, %37 in 0 : vector<1x8x8xf32>, vector<1x8x8xf32>, vector<1x8x8xf32>, vector<1x8x8xf32> -> vector<4x8x8xf32>
    %39 = vector.extract_strided_slice %30 {offsets = [0, 0, 0], sizes = [1, 8, 8], strides = [1, 1, 1]} : vector<1x8x32xf32> to vector<1x8x8xf32>
    %40 = vector.extract_strided_slice %30 {offsets = [0, 0, 8], sizes = [1, 8, 8], strides = [1, 1, 1]} : vector<1x8x32xf32> to vector<1x8x8xf32>
    %41 = vector.extract_strided_slice %30 {offsets = [0, 0, 16], sizes = [1, 8, 8], strides = [1, 1, 1]} : vector<1x8x32xf32> to vector<1x8x8xf32>
    %42 = vector.extract_strided_slice %30 {offsets = [0, 0, 24], sizes = [1, 8, 8], strides = [1, 1, 1]} : vector<1x8x32xf32> to vector<1x8x8xf32>
    %43 = tpu.concatenate %39, %40, %41, %42 in 0 : vector<1x8x8xf32>, vector<1x8x8xf32>, vector<1x8x8xf32>, vector<1x8x8xf32> -> vector<4x8x8xf32>
    %44 = vector.extract_strided_slice %33 {offsets = [0, 0, 0], sizes = [1, 8, 8], strides = [1, 1, 1]} : vector<1x8x32xf32> to vector<1x8x8xf32>
    %45 = vector.extract_strided_slice %33 {offsets = [0, 0, 8], sizes = [1, 8, 8], strides = [1, 1, 1]} : vector<1x8x32xf32> to vector<1x8x8xf32>
    %46 = vector.extract_strided_slice %33 {offsets = [0, 0, 16], sizes = [1, 8, 8], strides = [1, 1, 1]} : vector<1x8x32xf32> to vector<1x8x8xf32>
    %47 = vector.extract_strided_slice %33 {offsets = [0, 0, 24], sizes = [1, 8, 8], strides = [1, 1, 1]} : vector<1x8x32xf32> to vector<1x8x8xf32>
    %48 = tpu.concatenate %44, %45, %46, %47 in 0 : vector<1x8x8xf32>, vector<1x8x8xf32>, vector<1x8x8xf32>, vector<1x8x8xf32> -> vector<4x8x8xf32>
    "tpu.trace_start"() <{level = 10 : i32, message = "znd,zmd->znm"}> : () -> ()
    %cst_18 = arith.constant dense<0.000000e+00> : vector<4x8x8xf32>
    %49 = tpu.matmul %38, %43, %cst_18 {dimension_numbers = #tpu.dot_dimension_numbers<[2], [2], [1], [1], [0, 0, 0, 1, 1, 1], [0], [0]>} : vector<4x8x8xf32>, vector<4x8x8xf32>, vector<4x8x8xf32> -> vector<4x8x8xf32>
    "tpu.trace_stop"() : () -> ()
    %cst_19 = arith.constant dense<0xFF800000> : vector<4x8xf32>
    %50 = vector.multi_reduction <maximumf>, %49, %cst_19 [2] : vector<4x8x8xf32> to vector<4x8xf32>
    %51 = vector.shape_cast %50 : vector<4x8xf32> to vector<4x8x1xf32>
    %52 = vector.broadcast %51 : vector<4x8x1xf32> to vector<4x8x8xf32>
    %53 = arith.subf %49, %52 : vector<4x8x8xf32>
    %54 = math.exp %53 : vector<4x8x8xf32>
    %cst_20 = arith.constant dense<0.000000e+00> : vector<4x8xf32>
    %55 = vector.multi_reduction <add>, %54, %cst_20 [2] : vector<4x8x8xf32> to vector<4x8xf32>
    %56 = vector.shape_cast %55 : vector<4x8xf32> to vector<4x8x1xf32>
    %57 = tpu.reciprocal %56 {approx = true} : vector<4x8x1xf32> -> vector<4x8x1xf32>
    %58 = vector.broadcast %57 : vector<4x8x1xf32> to vector<4x8x8xf32>
    %59 = arith.mulf %54, %58 : vector<4x8x8xf32>
    "tpu.trace_start"() <{level = 10 : i32, message = "znm,zmd->znd"}> : () -> ()
    %cst_21 = arith.constant dense<0.000000e+00> : vector<4x8x8xf32>
    %60 = tpu.matmul %59, %48, %cst_21 {dimension_numbers = #tpu.dot_dimension_numbers<[2], [1], [1], [2], [0, 0, 0, 1, 1, 2], [0], [0]>} : vector<4x8x8xf32>, vector<4x8x8xf32>, vector<4x8x8xf32> -> vector<4x8x8xf32>
    "tpu.trace_stop"() : () -> ()
    %61 = vector.extract_strided_slice %60 {offsets = [0, 0, 0], sizes = [1, 8, 8], strides = [1, 1, 1]} : vector<4x8x8xf32> to vector<1x8x8xf32>
    %62 = vector.extract_strided_slice %60 {offsets = [1, 0, 0], sizes = [1, 8, 8], strides = [1, 1, 1]} : vector<4x8x8xf32> to vector<1x8x8xf32>
    %63 = vector.extract_strided_slice %60 {offsets = [2, 0, 0], sizes = [1, 8, 8], strides = [1, 1, 1]} : vector<4x8x8xf32> to vector<1x8x8xf32>
    %64 = vector.extract_strided_slice %60 {offsets = [3, 0, 0], sizes = [1, 8, 8], strides = [1, 1, 1]} : vector<4x8x8xf32> to vector<1x8x8xf32>
    %65 = tpu.concatenate %61, %62, %63, %64 in 2 : vector<1x8x8xf32>, vector<1x8x8xf32>, vector<1x8x8xf32>, vector<1x8x8xf32> -> vector<1x8x32xf32>
    %66 = vector.shape_cast %65 : vector<1x8x32xf32> to vector<8x32xf32>
    %c0_22 = arith.constant 0 : index
    %c0_23 = arith.constant 0 : index
    %67 = vector.load %arg7[%c0_22, %c0_23] : memref<32x32xf32, #tpu.memory_space<vmem>>, vector<32x32xf32>
    %cst_24 = arith.constant dense<0.000000e+00> : vector<8x32xf32>
    %68 = tpu.matmul %66, %67, %cst_24 {dimension_numbers = #tpu.dot_dimension_numbers<[1], [0], [0], [1], [0, 0, 1, 1], [], []>} : vector<8x32xf32>, vector<32x32xf32>, vector<8x32xf32> -> vector<8x32xf32>
    %69 = arith.addf %0, %68 : vector<8x32xf32>
    %c0_25 = arith.constant 0 : index
    %c0_26 = arith.constant 0 : index
    %70 = vector.load %arg8[%c0_25, %c0_26] : memref<1x32xf32, #tpu.memory_space<vmem>>, vector<1x32xf32>
    %71 = vector.broadcast %70 : vector<1x32xf32> to vector<8x32xf32>
    %72 = arith.addf %69, %71 : vector<8x32xf32>
    %c0_27 = arith.constant 0 : index
    %c0_28 = arith.constant 0 : index
    %73 = vector.load %arg9[%c0_27, %c0_28] : memref<1x32xf32, #tpu.memory_space<vmem>>, vector<1x32xf32>
    %c0_29 = arith.constant 0 : index
    %c0_30 = arith.constant 0 : index
    %74 = vector.load %arg10[%c0_29, %c0_30] : memref<1x32xf32, #tpu.memory_space<vmem>>, vector<1x32xf32>
    %cst_31 = arith.constant dense<0.000000e+00> : vector<8xf32>
    %75 = vector.multi_reduction <add>, %72, %cst_31 [1] : vector<8x32xf32> to vector<8xf32>
    %76 = vector.shape_cast %75 : vector<8xf32> to vector<8x1xf32>
    %cst_32 = arith.constant 3.200000e+01 : f32
    %77 = vector.broadcast %cst_32 : f32 to vector<8x1xf32>
    %78 = arith.divf %76, %77 : vector<8x1xf32>
    %79 = vector.broadcast %78 : vector<8x1xf32> to vector<8x32xf32>
    %80 = arith.subf %72, %79 : vector<8x32xf32>
    %81 = arith.mulf %80, %80 : vector<8x32xf32>
    %cst_33 = arith.constant dense<0.000000e+00> : vector<8xf32>
    %82 = vector.multi_reduction <add>, %81, %cst_33 [1] : vector<8x32xf32> to vector<8xf32>
    %83 = vector.shape_cast %82 : vector<8xf32> to vector<8x1xf32>
    %cst_34 = arith.constant 3.200000e+01 : f32
    %84 = vector.broadcast %cst_34 : f32 to vector<8x1xf32>
    %85 = arith.divf %83, %84 : vector<8x1xf32>
    %86 = vector.broadcast %78 : vector<8x1xf32> to vector<8x32xf32>
    %87 = arith.subf %72, %86 : vector<8x32xf32>
    %cst_35 = arith.constant 9.99999974E-6 : f32
    %88 = vector.broadcast %cst_35 : f32 to vector<8x1xf32>
    %89 = arith.addf %85, %88 : vector<8x1xf32>
    %90 = math.rsqrt %89 : vector<8x1xf32>
    %91 = vector.broadcast %90 : vector<8x1xf32> to vector<8x32xf32>
    %92 = arith.mulf %87, %91 : vector<8x32xf32>
    %93 = vector.broadcast %73 : vector<1x32xf32> to vector<8x32xf32>
    %94 = arith.mulf %92, %93 : vector<8x32xf32>
    %95 = vector.broadcast %74 : vector<1x32xf32> to vector<8x32xf32>
    %96 = arith.addf %94, %95 : vector<8x32xf32>
    %c0_36 = arith.constant 0 : index
    %c0_37 = arith.constant 0 : index
    %97 = vector.load %arg11[%c0_36, %c0_37] : memref<32x128xf32, #tpu.memory_space<vmem>>, vector<32x128xf32>
    %cst_38 = arith.constant dense<0.000000e+00> : vector<8x128xf32>
    %98 = tpu.matmul %96, %97, %cst_38 {dimension_numbers = #tpu.dot_dimension_numbers<[1], [0], [0], [1], [0, 0, 1, 1], [], []>} : vector<8x32xf32>, vector<32x128xf32>, vector<8x128xf32> -> vector<8x128xf32>
    %c0_39 = arith.constant 0 : index
    %c0_40 = arith.constant 0 : index
    %99 = vector.load %arg12[%c0_39, %c0_40] : memref<1x128xf32, #tpu.memory_space<vmem>>, vector<1x128xf32>
    %100 = vector.broadcast %99 : vector<1x128xf32> to vector<8x128xf32>
    %101 = arith.addf %98, %100 : vector<8x128xf32>
    %cst_41 = arith.constant 5.000000e-01 : f32
    %102 = vector.broadcast %cst_41 : f32 to vector<8x128xf32>
    %103 = arith.mulf %102, %101 : vector<8x128xf32>
    %cst_42 = arith.constant 0.707106769 : f32
    %104 = vector.broadcast %cst_42 : f32 to vector<8x128xf32>
    %105 = arith.mulf %101, %104 : vector<8x128xf32>
    %106 = math.erf %105 : vector<8x128xf32>
    %cst_43 = arith.constant 1.000000e+00 : f32
    %107 = vector.broadcast %cst_43 : f32 to vector<8x128xf32>
    %108 = arith.addf %107, %106 : vector<8x128xf32>
    %109 = arith.mulf %103, %108 : vector<8x128xf32>
    %c0_44 = arith.constant 0 : index
    %c0_45 = arith.constant 0 : index
    %110 = vector.load %arg13[%c0_44, %c0_45] : memref<128x32xf32, #tpu.memory_space<vmem>>, vector<128x32xf32>
    %cst_46 = arith.constant dense<0.000000e+00> : vector<8x32xf32>
    %111 = tpu.matmul %109, %110, %cst_46 {dimension_numbers = #tpu.dot_dimension_numbers<[1], [0], [0], [1], [0, 0, 1, 1], [], []>} : vector<8x128xf32>, vector<128x32xf32>, vector<8x32xf32> -> vector<8x32xf32>
    %c0_47 = arith.constant 0 : index
    %c0_48 = arith.constant 0 : index
    %112 = vector.load %arg14[%c0_47, %c0_48] : memref<1x32xf32, #tpu.memory_space<vmem>>, vector<1x32xf32>
    %113 = vector.broadcast %112 : vector<1x32xf32> to vector<8x32xf32>
    %114 = arith.addf %111, %113 : vector<8x32xf32>
    %115 = arith.addf %72, %114 : vector<8x32xf32>
    %c0_49 = arith.constant 0 : index
    %c0_50 = arith.constant 0 : index
    %116 = vector.load %arg15[%c0_49, %c0_50] : memref<8x32xf32, #tpu.memory_space<vmem>>, vector<8x32xf32>
    tpu.vector_store %arg15[%c0_49, %c0_50], %115 {strides = array<i32>} : memref<8x32xf32, #tpu.memory_space<vmem>>, vector<8x32xf32>,
    return
  }
  func.func @transform_0(%arg0: i32) -> (i32, i32) {
    %c0_i32 = arith.constant 0 : i32
    %c0_i32_0 = arith.constant 0 : i32
    return %arg0, %c0_i32 : i32, i32
  }
  func.func @transform_1(%arg0: i32) -> (i32, i32) {
    %c0_i32 = arith.constant 0 : i32
    %c0_i32_0 = arith.constant 0 : i32
    %c0_i32_1 = arith.constant 0 : i32
    return %c0_i32, %c0_i32_0 : i32, i32
  }
  func.func @transform_2(%arg0: i32) -> (i32, i32) {
    %c0_i32 = arith.constant 0 : i32
    %c0_i32_0 = arith.constant 0 : i32
    %c0_i32_1 = arith.constant 0 : i32
    return %c0_i32, %c0_i32_0 : i32, i32
  }
  func.func @transform_3(%arg0: i32) -> (i32, i32) {
    %c0_i32 = arith.constant 0 : i32
    %c0_i32_0 = arith.constant 0 : i32
    %c0_i32_1 = arith.constant 0 : i32
    return %c0_i32, %c0_i32_0 : i32, i32
  }
  func.func @transform_4(%arg0: i32) -> (i32, i32) {
    %c0_i32 = arith.constant 0 : i32
    %c0_i32_0 = arith.constant 0 : i32
    %c0_i32_1 = arith.constant 0 : i32
    return %c0_i32, %c0_i32_0 : i32, i32
  }
  func.func @transform_5(%arg0: i32) -> (i32, i32) {
    %c0_i32 = arith.constant 0 : i32
    %c0_i32_0 = arith.constant 0 : i32
    %c0_i32_1 = arith.constant 0 : i32
    return %c0_i32, %c0_i32_0 : i32, i32
  }
  func.func @transform_6(%arg0: i32) -> (i32, i32) {
    %c0_i32 = arith.constant 0 : i32
    %c0_i32_0 = arith.constant 0 : i32
    %c0_i32_1 = arith.constant 0 : i32
    return %c0_i32, %c0_i32_0 : i32, i32
  }
  func.func @transform_7(%arg0: i32) -> (i32, i32) {
    %c0_i32 = arith.constant 0 : i32
    %c0_i32_0 = arith.constant 0 : i32
    %c0_i32_1 = arith.constant 0 : i32
    return %c0_i32, %c0_i32_0 : i32, i32
  }
  func.func @transform_8(%arg0: i32) -> (i32, i32) {
    %c0_i32 = arith.constant 0 : i32
    %c0_i32_0 = arith.constant 0 : i32
    %c0_i32_1 = arith.constant 0 : i32
    return %c0_i32, %c0_i32_0 : i32, i32
  }
  func.func @transform_9(%arg0: i32) -> (i32, i32) {
    %c0_i32 = arith.constant 0 : i32
    %c0_i32_0 = arith.constant 0 : i32
    %c0_i32_1 = arith.constant 0 : i32
    return %c0_i32, %c0_i32_0 : i32, i32
  }
  func.func @transform_10(%arg0: i32) -> (i32, i32) {
    %c0_i32 = arith.constant 0 : i32
    %c0_i32_0 = arith.constant 0 : i32
    %c0_i32_1 = arith.constant 0 : i32
    return %c0_i32, %c0_i32_0 : i32, i32
  }
  func.func @transform_11(%arg0: i32) -> (i32, i32) {
    %c0_i32 = arith.constant 0 : i32
    %c0_i32_0 = arith.constant 0 : i32
    %c0_i32_1 = arith.constant 0 : i32
    return %c0_i32, %c0_i32_0 : i32, i32
  }
  func.func @transform_12(%arg0: i32) -> (i32, i32) {
    %c0_i32 = arith.constant 0 : i32
    %c0_i32_0 = arith.constant 0 : i32
    %c0_i32_1 = arith.constant 0 : i32
    return %c0_i32, %c0_i32_0 : i32, i32
  }
  func.func @transform_13(%arg0: i32) -> (i32, i32) {
    %c0_i32 = arith.constant 0 : i32
    %c0_i32_0 = arith.constant 0 : i32
    %c0_i32_1 = arith.constant 0 : i32
    return %c0_i32, %c0_i32_0 : i32, i32
  }
  func.func @transform_14(%arg0: i32) -> (i32, i32) {
    %c0_i32 = arith.constant 0 : i32
    %c0_i32_0 = arith.constant 0 : i32
    return %arg0, %c0_i32 : i32, i32
  }
}

</mosaic_0001>

<llo_original>
// kernel: tpu_custom_call.1
$region0: #{tpu_custom_call.1}
  #allocation0 [shape = 'u32[]', space=smem, size = 0x4, offset = 0x4, fixed_abs, tag = 'smem constant byte address 0x4 - core index']
  #allocation1 [shape = 'u32[72,128]{1,0:T(1,128)}', space=vmem, size = 0x9000, scoped, tag = 'internal scratch']
  %s0 = inlined_call_operand.hbm [shape: f32[16,32], index: 0, kind: input, shape index: {}]
  %s1 = inlined_call_operand.hbm [shape: f32[1,32], index: 1, kind: input, shape index: {}]
  %s2 = inlined_call_operand.vmem [shape: f32[1,32], index: 2, kind: input, shape index: {}]
  %s3 = inlined_call_operand.vmem [shape: f32[32,32], index: 3, kind: input, shape index: {}]
  %s4 = inlined_call_operand.vmem [shape: f32[32,32], index: 4, kind: input, shape index: {}]
  %s5 = inlined_call_operand.vmem [shape: f32[32,32], index: 5, kind: input, shape index: {}]
  %s6 = inlined_call_operand.vmem [shape: f32[32,32], index: 6, kind: input, shape index: {}]
  %s7 = inlined_call_operand.vmem [shape: f32[1,32], index: 7, kind: input, shape index: {}]
  %s8 = inlined_call_operand.vmem [shape: f32[1,32], index: 8, kind: input, shape index: {}]
  %s9 = inlined_call_operand.vmem [shape: f32[1,32], index: 9, kind: input, shape index: {}]
  %s10 = inlined_call_operand.vmem [shape: f32[32,128], index: 10, kind: input, shape index: {}]
  %s11 = inlined_call_operand.vmem [shape: f32[1,128], index: 11, kind: input, shape index: {}]
  %s12 = inlined_call_operand.vmem [shape: f32[128,32], index: 12, kind: input, shape index: {}]
  %s13 = inlined_call_operand.vmem [shape: f32[1,32], index: 13, kind: input, shape index: {}]
  %s14 = inlined_call_operand.hbm [shape: f32[16,32], index: 14, kind: output, shape index: {}]
  %s15 = sld [smem:[#allocation0]]
  $region97: #{tpu_custom_call.1} parent=0
    _
  %s17 = ssub.s32 1, %s15
  %s18 = scalar_select 0, %s17, %s15
  $region1: #{tpu_custom_call.1} parent=0
    #allocation2 [shape = 'u8[8192]{0}', space=vmem, size = 0x2000, scoped, tag = 'input window, operand 0']
    #allocation3 [shape = 's32[2]{0}', space=sflag, size = 0x8, scoped, tag = 'scoped memory for tpu_custom_call.1']
    #allocation4 [shape = 's32[2]{0}', space=sflag, size = 0x8, scoped, tag = 'scoped memory for tpu_custom_call.1']
    #allocation5 [shape = 'u8[512]{0}', space=vmem, size = 0x400, scoped, tag = 'input window, operand 1, single buffered']
    #allocation6 [shape = 's32[1]{0}', space=sflag, size = 0x4, scoped, tag = 'scoped memory for tpu_custom_call.1']
    #allocation7 [shape = 'u8[8192]{0}', space=vmem, size = 0x2000, scoped, tag = 'output window, operand 0']
    %19 = vsyncpa [#allocation3], 0
    %s20 = scalar_lea.sflag [#allocation3], 1
    %21 = vsyncpa %s20, 0
    %22 = vsyncpa [#allocation6], 0
    %23 = vsyncpa [#allocation4], 0
    %s24 = scalar_lea.sflag [#allocation4], 1
    %25 = vsyncpa %s24, 0
    loop: start=0, step=1, limit=4
    $region2: #{tpu_custom_call.1} parent=1 // loop_pre_header
      _
    $region3: #{tpu_custom_call.1} parent=1 // loop_header
      %s27 = sphi 0, %s31
      %p28 = scmp.ge.s32.totalorder %s27, 4
      %s37 = sphi 0, %s39
      %s40 = sphi 0, %s37
      %s41 = sphi 0, %s40
      %s57 = sphi 0, %s41
      %s61 = sphi 0, %s61
      %s63 = sphi 0, %s61
      %s64 = sphi 0, %s63
      %s78 = sphi 0, %s64
      %s82 = sphi 0, %s82
      %s84 = sphi 0, %s82
      %s85 = sphi 0, %s84
      %s99 = sphi 0, %s85
      %s103 = sphi 0, %s103
      %s105 = sphi 0, %s103
      %s106 = sphi 0, %s105
      %s120 = sphi 0, %s106
      %s124 = sphi 0, %s124
      %s126 = sphi 0, %s124
      %s127 = sphi 0, %s126
      %s141 = sphi 0, %s127
      %s145 = sphi 0, %s145
      %s147 = sphi 0, %s145
      %s148 = sphi 0, %s147
      %s162 = sphi 0, %s148
      %s166 = sphi 0, %s166
      %s168 = sphi 0, %s166
      %s169 = sphi 0, %s168
      %s183 = sphi 0, %s169
      %s187 = sphi 0, %s187
      %s189 = sphi 0, %s187
      %s190 = sphi 0, %s189
      %s204 = sphi 0, %s190
      %s208 = sphi 0, %s208
      %s210 = sphi 0, %s208
      %s211 = sphi 0, %s210
      %s225 = sphi 0, %s211
      %s229 = sphi 0, %s229
      %s231 = sphi 0, %s229
      %s232 = sphi 0, %s231
      %s246 = sphi 0, %s232
      %s250 = sphi 0, %s250
      %s252 = sphi 0, %s250
      %s253 = sphi 0, %s252
      %s267 = sphi 0, %s253
      %s271 = sphi 0, %s271
      %s273 = sphi 0, %s271
      %s274 = sphi 0, %s273
      %s288 = sphi 0, %s274
      %s292 = sphi 0, %s292
      %s294 = sphi 0, %s292
      %s295 = sphi 0, %s294
      %s309 = sphi 0, %s295
      %s313 = sphi 0, %s313
      %s315 = sphi 0, %s313
      %s316 = sphi 0, %s315
      %s330 = sphi 0, %s316
      %s336 = sphi 0, %s338
      %s339 = sphi 0, %s336
      %s340 = sphi 0, %s339
      %s356 = sphi 0, %s340
    $region4: #{tpu_custom_call.1} parent=1 // loop_header_branch
      %30 = sbr.rel (%p28) target = $region8
    $region5: #{tpu_custom_call.1} parent=1 // loop_body
      %s32 = ssub.s32 %s27, 1
      %s33 = ssub.s32 %s27, 2
      %s34 = sadd.s32 %s27, 1
      %s35 = ssub.s32 %s27, %s34
      %p36 = scmp.eq.s32.totalorder %s35, 0
      %s38 = sadd.s32 %s37, 1
      %s39 = scalar_select %p36, %s37, %s38
      %p42 = pneg %p36
      %p43 = scmp.eq.s32.totalorder %s27, 1
      %p44 = por %p42, %p43
      %p45 = scmp.ne.s32.totalorder %s37, %s40
      %p46 = scmp.eq.s32.totalorder %s27, 0
      %p47 = por %p45, %p46
      %p48 = scmp.ne.s32.totalorder %s37, %s40
      %p49 = scmp.eq.s32.totalorder %s32, 1
      %p50 = por %p48, %p49
      %p51 = scmp.ne.s32.totalorder %s40, %s41
      %p52 = scmp.eq.s32.totalorder %s32, 0
      %p53 = por %p51, %p52
      %p54 = scmp.ne.s32.totalorder %s40, %s41
      %p55 = scmp.eq.s32.totalorder %s33, 1
      %p56 = por %p54, %p55
      %p58 = scmp.ne.s32.totalorder %s41, %s57
      %p59 = scmp.eq.s32.totalorder %s33, 0
      %p60 = por %p58, %p59
      %s62 = sadd.s32 %s61, 1
      %p65 = scmp.eq.s32.totalorder %s27, 1
      %p66 = scmp.ne.s32.totalorder %s61, %s63
      %p67 = scmp.eq.s32.totalorder %s27, 0
      %p68 = por %p66, %p67
      %p69 = scmp.ne.s32.totalorder %s61, %s63
      %p70 = scmp.eq.s32.totalorder %s32, 1
      %p71 = por %p69, %p70
      %p72 = scmp.ne.s32.totalorder %s63, %s64
      %p73 = scmp.eq.s32.totalorder %s32, 0
      %p74 = por %p72, %p73
      %p75 = scmp.ne.s32.totalorder %s63, %s64
      %p76 = scmp.eq.s32.totalorder %s33, 1
      %p77 = por %p75, %p76
      %p79 = scmp.ne.s32.totalorder %s64, %s78
      %p80 = scmp.eq.s32.totalorder %s33, 0
      %p81 = por %p79, %p80
      %s83 = sadd.s32 %s82, 1
      %p86 = scmp.eq.s32.totalorder %s27, 1
      %p87 = scmp.ne.s32.totalorder %s82, %s84
      %p88 = scmp.eq.s32.totalorder %s27, 0
      %p89 = por %p87, %p88
      %p90 = scmp.ne.s32.totalorder %s82, %s84
      %p91 = scmp.eq.s32.totalorder %s32, 1
      %p92 = por %p90, %p91
      %p93 = scmp.ne.s32.totalorder %s84, %s85
      %p94 = scmp.eq.s32.totalorder %s32, 0
      %p95 = por %p93, %p94
      %p96 = scmp.ne.s32.totalorder %s84, %s85
      %p97 = scmp.eq.s32.totalorder %s33, 1
      %p98 = por %p96, %p97
      %p100 = scmp.ne.s32.totalorder %s85, %s99
      %p101 = scmp.eq.s32.totalorder %s33, 0
      %p102 = por %p100, %p101
      %s104 = sadd.s32 %s103, 1
      %p107 = scmp.eq.s32.totalorder %s27, 1
      %p108 = scmp.ne.s32.totalorder %s103, %s105
      %p109 = scmp.eq.s32.totalorder %s27, 0
      %p110 = por %p108, %p109
      %p111 = scmp.ne.s32.totalorder %s103, %s105
      %p112 = scmp.eq.s32.totalorder %s32, 1
      %p113 = por %p111, %p112
      %p114 = scmp.ne.s32.totalorder %s105, %s106
      %p115 = scmp.eq.s32.totalorder %s32, 0
      %p116 = por %p114, %p115
      %p117 = scmp.ne.s32.totalorder %s105, %s106
      %p118 = scmp.eq.s32.totalorder %s33, 1
      %p119 = por %p117, %p118
      %p121 = scmp.ne.s32.totalorder %s106, %s120
      %p122 = scmp.eq.s32.totalorder %s33, 0
      %p123 = por %p121, %p122
      %s125 = sadd.s32 %s124, 1
      %p128 = scmp.eq.s32.totalorder %s27, 1
      %p129 = scmp.ne.s32.totalorder %s124, %s126
      %p130 = scmp.eq.s32.totalorder %s27, 0
      %p131 = por %p129, %p130
      %p132 = scmp.ne.s32.totalorder %s124, %s126
      %p133 = scmp.eq.s32.totalorder %s32, 1
      %p134 = por %p132, %p133
      %p135 = scmp.ne.s32.totalorder %s126, %s127
      %p136 = scmp.eq.s32.totalorder %s32, 0
      %p137 = por %p135, %p136
      %p138 = scmp.ne.s32.totalorder %s126, %s127
      %p139 = scmp.eq.s32.totalorder %s33, 1
      %p140 = por %p138, %p139
      %p142 = scmp.ne.s32.totalorder %s127, %s141
      %p143 = scmp.eq.s32.totalorder %s33, 0
      %p144 = por %p142, %p143
      %s146 = sadd.s32 %s145, 1
      %p149 = scmp.eq.s32.totalorder %s27, 1
      %p150 = scmp.ne.s32.totalorder %s145, %s147
      %p151 = scmp.eq.s32.totalorder %s27, 0
      %p152 = por %p150, %p151
      %p153 = scmp.ne.s32.totalorder %s145, %s147
      %p154 = scmp.eq.s32.totalorder %s32, 1
      %p155 = por %p153, %p154
      %p156 = scmp.ne.s32.totalorder %s147, %s148
      %p157 = scmp.eq.s32.totalorder %s32, 0
      %p158 = por %p156, %p157
      %p159 = scmp.ne.s32.totalorder %s147, %s148
      %p160 = scmp.eq.s32.totalorder %s33, 1
      %p161 = por %p159, %p160
      %p163 = scmp.ne.s32.totalorder %s148, %s162
      %p164 = scmp.eq.s32.totalorder %s33, 0
      %p165 = por %p163, %p164
      %s167 = sadd.s32 %s166, 1
      %p170 = scmp.eq.s32.totalorder %s27, 1
      %p171 = scmp.ne.s32.totalorder %s166, %s168
      %p172 = scmp.eq.s32.totalorder %s27, 0
      %p173 = por %p171, %p172
      %p174 = scmp.ne.s32.totalorder %s166, %s168
      %p175 = scmp.eq.s32.totalorder %s32, 1
      %p176 = por %p174, %p175
      %p177 = scmp.ne.s32.totalorder %s168, %s169
      %p178 = scmp.eq.s32.totalorder %s32, 0
      %p179 = por %p177, %p178
      %p180 = scmp.ne.s32.totalorder %s168, %s169
      %p181 = scmp.eq.s32.totalorder %s33, 1
      %p182 = por %p180, %p181
      %p184 = scmp.ne.s32.totalorder %s169, %s183
      %p185 = scmp.eq.s32.totalorder %s33, 0
      %p186 = por %p184, %p185
      %s188 = sadd.s32 %s187, 1
      %p191 = scmp.eq.s32.totalorder %s27, 1
      %p192 = scmp.ne.s32.totalorder %s187, %s189
      %p193 = scmp.eq.s32.totalorder %s27, 0
      %p194 = por %p192, %p193
      %p195 = scmp.ne.s32.totalorder %s187, %s189
      %p196 = scmp.eq.s32.totalorder %s32, 1
      %p197 = por %p195, %p196
      %p198 = scmp.ne.s32.totalorder %s189, %s190
      %p199 = scmp.eq.s32.totalorder %s32, 0
      %p200 = por %p198, %p199
      %p201 = scmp.ne.s32.totalorder %s189, %s190
      %p202 = scmp.eq.s32.totalorder %s33, 1
      %p203 = por %p201, %p202
      %p205 = scmp.ne.s32.totalorder %s190, %s204
      %p206 = scmp.eq.s32.totalorder %s33, 0
      %p207 = por %p205, %p206
      %s209 = sadd.s32 %s208, 1
      %p212 = scmp.eq.s32.totalorder %s27, 1
      %p213 = scmp.ne.s32.totalorder %s208, %s210
      %p214 = scmp.eq.s32.totalorder %s27, 0
      %p215 = por %p213, %p214
      %p216 = scmp.ne.s32.totalorder %s208, %s210
      %p217 = scmp.eq.s32.totalorder %s32, 1
      %p218 = por %p216, %p217
      %p219 = scmp.ne.s32.totalorder %s210, %s211
      %p220 = scmp.eq.s32.totalorder %s32, 0
      %p221 = por %p219, %p220
      %p222 = scmp.ne.s32.totalorder %s210, %s211
      %p223 = scmp.eq.s32.totalorder %s33, 1
      %p224 = por %p222, %p223
      %p226 = scmp.ne.s32.totalorder %s211, %s225
      %p227 = scmp.eq.s32.totalorder %s33, 0
      %p228 = por %p226, %p227
      %s230 = sadd.s32 %s229, 1
      %p233 = scmp.eq.s32.totalorder %s27, 1
      %p234 = scmp.ne.s32.totalorder %s229, %s231
      %p235 = scmp.eq.s32.totalorder %s27, 0
      %p236 = por %p234, %p235
      %p237 = scmp.ne.s32.totalorder %s229, %s231
      %p238 = scmp.eq.s32.totalorder %s32, 1
      %p239 = por %p237, %p238
      %p240 = scmp.ne.s32.totalorder %s231, %s232
      %p241 = scmp.eq.s32.totalorder %s32, 0
      %p242 = por %p240, %p241
      %p243 = scmp.ne.s32.totalorder %s231, %s232
      %p244 = scmp.eq.s32.totalorder %s33, 1
      %p245 = por %p243, %p244
      %p247 = scmp.ne.s32.totalorder %s232, %s246
      %p248 = scmp.eq.s32.totalorder %s33, 0
      %p249 = por %p247, %p248
      %s251 = sadd.s32 %s250, 1
      %p254 = scmp.eq.s32.totalorder %s27, 1
      %p255 = scmp.ne.s32.totalorder %s250, %s252
      %p256 = scmp.eq.s32.totalorder %s27, 0
      %p257 = por %p255, %p256
      %p258 = scmp.ne.s32.totalorder %s250, %s252
      %p259 = scmp.eq.s32.totalorder %s32, 1
      %p260 = por %p258, %p259
      %p261 = scmp.ne.s32.totalorder %s252, %s253
      %p262 = scmp.eq.s32.totalorder %s32, 0
      %p263 = por %p261, %p262
      %p264 = scmp.ne.s32.totalorder %s252, %s253
      %p265 = scmp.eq.s32.totalorder %s33, 1
      %p266 = por %p264, %p265
      %p268 = scmp.ne.s32.totalorder %s253, %s267
      %p269 = scmp.eq.s32.totalorder %s33, 0
      %p270 = por %p268, %p269
      %s272 = sadd.s32 %s271, 1
      %p275 = scmp.eq.s32.totalorder %s27, 1
      %p276 = scmp.ne.s32.totalorder %s271, %s273
      %p277 = scmp.eq.s32.totalorder %s27, 0
      %p278 = por %p276, %p277
      %p279 = scmp.ne.s32.totalorder %s271, %s273
      %p280 = scmp.eq.s32.totalorder %s32, 1
      %p281 = por %p279, %p280
      %p282 = scmp.ne.s32.totalorder %s273, %s274
      %p283 = scmp.eq.s32.totalorder %s32, 0
      %p284 = por %p282, %p283
      %p285 = scmp.ne.s32.totalorder %s273, %s274
      %p286 = scmp.eq.s32.totalorder %s33, 1
      %p287 = por %p285, %p286
      %p289 = scmp.ne.s32.totalorder %s274, %s288
      %p290 = scmp.eq.s32.totalorder %s33, 0
      %p291 = por %p289, %p290
      %s293 = sadd.s32 %s292, 1
      %p296 = scmp.eq.s32.totalorder %s27, 1
      %p297 = scmp.ne.s32.totalorder %s292, %s294
      %p298 = scmp.eq.s32.totalorder %s27, 0
      %p299 = por %p297, %p298
      %p300 = scmp.ne.s32.totalorder %s292, %s294
      %p301 = scmp.eq.s32.totalorder %s32, 1
      %p302 = por %p300, %p301
      %p303 = scmp.ne.s32.totalorder %s294, %s295
      %p304 = scmp.eq.s32.totalorder %s32, 0
      %p305 = por %p303, %p304
      %p306 = scmp.ne.s32.totalorder %s294, %s295
      %p307 = scmp.eq.s32.totalorder %s33, 1
      %p308 = por %p306, %p307
      %p310 = scmp.ne.s32.totalorder %s295, %s309
      %p311 = scmp.eq.s32.totalorder %s33, 0
      %p312 = por %p310, %p311
      %s314 = sadd.s32 %s313, 1
      %p317 = scmp.eq.s32.totalorder %s27, 1
      %p318 = scmp.ne.s32.totalorder %s313, %s315
      %p319 = scmp.eq.s32.totalorder %s27, 0
      %p320 = por %p318, %p319
      %p321 = scmp.ne.s32.totalorder %s313, %s315
      %p322 = scmp.eq.s32.totalorder %s32, 1
      %p323 = por %p321, %p322
      %p324 = scmp.ne.s32.totalorder %s315, %s316
      %p325 = scmp.eq.s32.totalorder %s32, 0
      %p326 = por %p324, %p325
      %p327 = scmp.ne.s32.totalorder %s315, %s316
      %p328 = scmp.eq.s32.totalorder %s33, 1
      %p329 = por %p327, %p328
      %p331 = scmp.ne.s32.totalorder %s316, %s330
      %p332 = scmp.eq.s32.totalorder %s33, 0
      %p333 = por %p331, %p332
      %s334 = ssub.s32 %s27, %s34
      %p335 = scmp.eq.s32.totalorder %s334, 0
      %s337 = sadd.s32 %s336, 1
      %s338 = scalar_select %p335, %s336, %s337
      %p341 = pneg %p335
      %p342 = scmp.eq.s32.totalorder %s27, 1
      %p343 = por %p341, %p342
      %p344 = scmp.ne.s32.totalorder %s336, %s339
      %p345 = scmp.eq.s32.totalorder %s27, 0
      %p346 = por %p344, %p345
      %p347 = scmp.ne.s32.totalorder %s336, %s339
      %p348 = scmp.eq.s32.totalorder %s32, 1
      %p349 = por %p347, %p348
      %p350 = scmp.ne.s32.totalorder %s339, %s340
      %p351 = scmp.eq.s32.totalorder %s32, 0
      %p352 = por %p350, %p351
      %p353 = scmp.ne.s32.totalorder %s339, %s340
      %p354 = scmp.eq.s32.totalorder %s33, 1
      %p355 = por %p353, %p354
      %p357 = scmp.ne.s32.totalorder %s340, %s356
      %p358 = scmp.eq.s32.totalorder %s33, 0
      %p359 = por %p357, %p358
      %p360 = scmp.le.s32.totalorder 1, %s27
      %p361 = scmp.lt.s32.totalorder %s27, 3
      %p362 = pnand %p360, %p361
      %p363 = pneg %p362
      // Predicated region
      $region9: #{tpu_custom_call.1} parent=5 // pred_check
        _
      $region10: #{tpu_custom_call.1} parent=5 // pred_check_branch
        %365 = sbr.rel (%p362) target = $region12
      $region11: #{tpu_custom_call.1} parent=5 // pred_region
        %s366 = ssub.s32 %s27, 1
        // Predicated region
        $region13: #{tpu_custom_call.1} parent=11 // pred_check
          %p367 = pneg %p74
        $region14: #{tpu_custom_call.1} parent=11 // pred_check_branch
          %369 = sbr.rel (%p367) target = $region16
        $region15: #{tpu_custom_call.1} parent=11 // pred_region
          %371 = vsyncadd [#allocation6], 0
          %s373 = sshll.u32 %s1, 4
          %s374 = int_to_ptr.hbm [resolvable:$true] %s373
          %s375 = sshll.u32 [#allocation5], 4
          %s376 = int_to_ptr.vmem [resolvable:$true] %s375
          %378 = dma.hbm_to_vmem [thread:$0]  %s374, 16, %s376, [#allocation6]
        $region16: #{tpu_custom_call.1} parent=11 // pred_fallthru
          _
        // Predicated region
        $region17: #{tpu_custom_call.1} parent=11 // pred_check
          %p379 = pneg %p95
        $region18: #{tpu_custom_call.1} parent=11 // pred_check_branch
          %381 = sbr.rel (%p379) target = $region20
        $region19: #{tpu_custom_call.1} parent=11 // pred_region
          _
        $region20: #{tpu_custom_call.1} parent=11 // pred_fallthru
          _
        // Predicated region
        $region21: #{tpu_custom_call.1} parent=11 // pred_check
          %p382 = pneg %p116
        $region22: #{tpu_custom_call.1} parent=11 // pred_check_branch
          %384 = sbr.rel (%p382) target = $region24
        $region23: #{tpu_custom_call.1} parent=11 // pred_region
          _
        $region24: #{tpu_custom_call.1} parent=11 // pred_fallthru
          _
        // Predicated region
        $region25: #{tpu_custom_call.1} parent=11 // pred_check
          %p385 = pneg %p137
        $region26: #{tpu_custom_call.1} parent=11 // pred_check_branch
          %387 = sbr.rel (%p385) target = $region28
        $region27: #{tpu_custom_call.1} parent=11 // pred_region
          _
        $region28: #{tpu_custom_call.1} parent=11 // pred_fallthru
          _
        // Predicated region
        $region29: #{tpu_custom_call.1} parent=11 // pred_check
          %p388 = pneg %p158
        $region30: #{tpu_custom_call.1} parent=11 // pred_check_branch
          %390 = sbr.rel (%p388) target = $region32
        $region31: #{tpu_custom_call.1} parent=11 // pred_region
          _
        $region32: #{tpu_custom_call.1} parent=11 // pred_fallthru
          _
        // Predicated region
        $region33: #{tpu_custom_call.1} parent=11 // pred_check
          %p391 = pneg %p179
        $region34: #{tpu_custom_call.1} parent=11 // pred_check_branch
          %393 = sbr.rel (%p391) target = $region36
        $region35: #{tpu_custom_call.1} parent=11 // pred_region
          _
        $region36: #{tpu_custom_call.1} parent=11 // pred_fallthru
          _
        // Predicated region
        $region37: #{tpu_custom_call.1} parent=11 // pred_check
          %p394 = pneg %p200
        $region38: #{tpu_custom_call.1} parent=11 // pred_check_branch
          %396 = sbr.rel (%p394) target = $region40
        $region39: #{tpu_custom_call.1} parent=11 // pred_region
          _
        $region40: #{tpu_custom_call.1} parent=11 // pred_fallthru
          _
        // Predicated region
        $region41: #{tpu_custom_call.1} parent=11 // pred_check
          %p397 = pneg %p221
        $region42: #{tpu_custom_call.1} parent=11 // pred_check_branch
          %399 = sbr.rel (%p397) target = $region44
        $region43: #{tpu_custom_call.1} parent=11 // pred_region
          _
        $region44: #{tpu_custom_call.1} parent=11 // pred_fallthru
          _
        // Predicated region
        $region45: #{tpu_custom_call.1} parent=11 // pred_check
          %p400 = pneg %p242
        $region46: #{tpu_custom_call.1} parent=11 // pred_check_branch
          %402 = sbr.rel (%p400) target = $region48
        $region47: #{tpu_custom_call.1} parent=11 // pred_region
          _
        $region48: #{tpu_custom_call.1} parent=11 // pred_fallthru
          _
        // Predicated region
        $region49: #{tpu_custom_call.1} parent=11 // pred_check
          %p403 = pneg %p263
        $region50: #{tpu_custom_call.1} parent=11 // pred_check_branch
          %405 = sbr.rel (%p403) target = $region52
        $region51: #{tpu_custom_call.1} parent=11 // pred_region
          _
        $region52: #{tpu_custom_call.1} parent=11 // pred_fallthru
          _
        // Predicated region
        $region53: #{tpu_custom_call.1} parent=11 // pred_check
          %p406 = pneg %p284
        $region54: #{tpu_custom_call.1} parent=11 // pred_check_branch
          %408 = sbr.rel (%p406) target = $region56
        $region55: #{tpu_custom_call.1} parent=11 // pred_region
          _
        $region56: #{tpu_custom_call.1} parent=11 // pred_fallthru
          _
        // Predicated region
        $region57: #{tpu_custom_call.1} parent=11 // pred_check
          %p409 = pneg %p305
        $region58: #{tpu_custom_call.1} parent=11 // pred_check_branch
          %411 = sbr.rel (%p409) target = $region60
        $region59: #{tpu_custom_call.1} parent=11 // pred_region
          _
        $region60: #{tpu_custom_call.1} parent=11 // pred_fallthru
          _
        // Predicated region
        $region61: #{tpu_custom_call.1} parent=11 // pred_check
          %p412 = pneg %p326
        $region62: #{tpu_custom_call.1} parent=11 // pred_check_branch
          %414 = sbr.rel (%p412) target = $region64
        $region63: #{tpu_custom_call.1} parent=11 // pred_region
          _
        $region64: #{tpu_custom_call.1} parent=11 // pred_fallthru
          _
      $region12: #{tpu_custom_call.1} parent=5 // pred_fallthru
        _
      %p415 = scmp.lt.s32.totalorder %s27, 2
      // Predicated region
      $region65: #{tpu_custom_call.1} parent=5 // pred_check
        %p416 = pneg %p415
      $region66: #{tpu_custom_call.1} parent=5 // pred_check_branch
        %418 = sbr.rel (%p416) target = $region68
      $region67: #{tpu_custom_call.1} parent=5 // pred_region
        // Predicated region
        $region69: #{tpu_custom_call.1} parent=67 // pred_check
          %p419 = pneg %p47
        $region70: #{tpu_custom_call.1} parent=67 // pred_check_branch
          %421 = sbr.rel (%p419) target = $region72
        $region71: #{tpu_custom_call.1} parent=67 // pred_region
          %s422 = sand.u32 %s37, 1
          %s423 = scalar_lea.sflag [#allocation3], %s422
          %s424 = sand.u32 %s37, 1
          %s425 = smul.addr %s424, 8
          %s426 = scalar_lea.vmem [#allocation2], %s425
          %428 = vsyncadd %s423, 0
          %s429 = smul.addr %s27, 8
          %s430 = scalar_lea.hbm %s0, %s429
          %s432 = sshll.u32 %s430, 4
          %s433 = int_to_ptr.hbm [resolvable:$true] %s432
          %s434 = sshll.u32 %s426, 4
          %s435 = int_to_ptr.vmem [resolvable:$true] %s434
          %437 = dma.hbm_to_vmem [thread:$0]  %s433, 128, %s435, %s423
        $region72: #{tpu_custom_call.1} parent=67 // pred_fallthru
          _
      $region68: #{tpu_custom_call.1} parent=5 // pred_fallthru
        _
      %p438 = scmp.le.s32.totalorder 1, %s27
      %p439 = scmp.lt.s32.totalorder %s27, 3
      %p440 = pnand %p438, %p439
      %p441 = pneg %p440
      // Predicated region
      $region73: #{tpu_custom_call.1} parent=5 // pred_check
        _
      $region74: #{tpu_custom_call.1} parent=5 // pred_check_branch
        %443 = sbr.rel (%p440) target = $region76
      $region75: #{tpu_custom_call.1} parent=5 // pred_region
        %s444 = ssub.s32 %s27, 1
        %s445 = sand.u32 %s40, 1
        %s446 = scalar_lea.sflag [#allocation3], %s445
        %s447 = sand.u32 %s40, 1
        %s448 = smul.addr %s447, 8
        %s449 = scalar_lea.vmem [#allocation2], %s448
        // Predicated region
        $region77: #{tpu_custom_call.1} parent=75 // pred_check
          %p450 = pneg %p53
        $region78: #{tpu_custom_call.1} parent=75 // pred_check_branch
          %452 = sbr.rel (%p450) target = $region80
        $region79: #{tpu_custom_call.1} parent=75 // pred_region
          %454 = dma.done %s446, 128
        $region80: #{tpu_custom_call.1} parent=75 // pred_fallthru
          _
        // Predicated region
        $region81: #{tpu_custom_call.1} parent=75 // pred_check
          %p455 = pneg %p74
        $region82: #{tpu_custom_call.1} parent=75 // pred_check_branch
          %457 = sbr.rel (%p455) target = $region84
        $region83: #{tpu_custom_call.1} parent=75 // pred_region
          %459 = dma.done [#allocation6], 16
        $region84: #{tpu_custom_call.1} parent=75 // pred_fallthru
          _
        %s460 = sand.u32 %s40, 1
        %s461 = scalar_lea.sflag [#allocation3], %s460
        %s462 = sand.u32 %s40, 1
        %s463 = smul.addr %s462, 8
        %s464 = scalar_lea.vmem [#allocation2], %s463
        %p465 = pneg %p53
        %p466 = pneg %p50
        %p467 = pneg %p74
        %p468 = pneg %p71
        %p469 = pneg %p95
        %p470 = pneg %p92
        %p471 = pneg %p116
        %p472 = pneg %p113
        %p473 = pneg %p137
        %p474 = pneg %p134
        %p475 = pneg %p158
        %p476 = pneg %p155
        %p477 = pneg %p179
        %p478 = pneg %p176
        %p479 = pneg %p200
        %p480 = pneg %p197
        %p481 = pneg %p221
        %p482 = pneg %p218
        %p483 = pneg %p242
        %p484 = pneg %p239
        %p485 = pneg %p263
        %p486 = pneg %p260
        %p487 = pneg %p284
        %p488 = pneg %p281
        %p489 = pneg %p305
        %p490 = pneg %p302
        %p491 = pneg %p326
        %p492 = pneg %p323
        %p493 = pneg %p352
        %p494 = pneg %p349
        %s495 = sand.u32 %s339, 1
        %s496 = scalar_lea.sflag [#allocation4], %s495
        %s497 = sand.u32 %s339, 1
        %s498 = smul.addr %s497, 8
        %s499 = scalar_lea.vmem [#allocation7], %s498
        %v500 = vld [vmem:[%s449] sm:$0xff]
        %v501 = vld [vmem:[#allocation5] sm:$0x1]
        %v502 = vld [vmem:[%s2] sm:$0x1]
        %vm503 = vcmask 261120
        %v504 = vsel %vm503, %v500, 0.0
        %505 = vadd.xlane.f32.xlu0 %v504
        %v506 = vpop.xlane.xlu0 %505
        %v507 = vrcp.pop 32.0
        %v508 = vmul.f32 32.0, %v507
        %v509 = vsub.f32 1.0, %v508
        %v510 = vmul.f32 %v507, %v509
        %v511 = vadd.f32 %v507, %v510
        %vm512 = vweird.f32 %v507
        %v513 = vsel %vm512, %v507, %v511
        %v514 = vmul.f32 %v506, %v513
        %v515 = vsub.f32 %v500, %v514
        %v516 = vmul.f32 %v515, %v515
        %v517 = vsel %vm503, %v516, 0.0
        %518 = vadd.xlane.f32.xlu0 %v517
        %v519 = vpop.xlane.xlu0 %518
        %v520 = vmul.f32 %v519, %v513
        %v521 = vadd.f32 %v520, 1e-05
        %v522 = vrsqrt.pop %v521
        %v523 = vmul.f32 %v522, %v521
        %v524 = vmul.f32 %v523, %v522
        %v525 = vmul.f32 0.5, %v524
        %v526 = vsub.f32 1.5, %v525
        %v527 = vmul.f32 %v522, %v526
        %vm528 = vweird.f32 %v521
        %vm529 = vweird.f32 %v522
        %vm530 = vmor %vm528, %vm529
        %v531 = vsel %vm530, %v522, %v527
        %v532 = vmul.f32 %v515, %v531
        %v534 = vperm.slane %v501, 0
        %v536 = vmul.f32 %v532, %v534
        %v538 = vperm.slane %v502, 0
        %v540 = vadd.f32 %v536, %v538
        %v541 = vld [vmem:[%s3] sm:$0xff]
        %v542 = vld [vmem:[%s3 + $0x8] sm:$0xff]
        %v543 = vld [vmem:[%s3 + $0x10] sm:$0xff]
        %v544 = vld [vmem:[%s3 + $0x18] sm:$0xff]
        %v546 = vsel %vm503, %v540, 0
        %548 = vmatpush.msra.mxu0 0.0
        %549 = vmatpush.msra.mxu0 0.0
        %550 = vmatpush.msra.mxu0 0.0
        %551 = vmatpush.msra.mxu0 0.0
        %552 = vmatpush.msra.mxu0 0.0
        %553 = vmatpush.msra.mxu0 0.0
        %554 = vmatpush.msra.mxu0 0.0
        %555 = vmatpush.msra.mxu0 0.0
        %556 = vmatpush.msra.mxu0 0.0
        %557 = vmatpush.msra.mxu0 0.0
        %558 = vmatpush.msra.mxu0 0.0
        %559 = vmatpush.msra.mxu0 0.0
        %560 = vmatpush.msra.mxu0 %v544
        %561 = vmatpush.msra.mxu0 %v543
        %562 = vmatpush.msra.mxu0 %v542
        %563 = vmatpush.msra.mxu0 %v541
        %564 = vmatmul.f32.gmra.mxu0 %v546
        %v565 = vpop.f32.mrf.mxu0
        %v566 = vadd.f32 0.0, %v565
        %567 = vdwg.mxu0
        %v568 = vld [vmem:[%s4] sm:$0xff]
        %v569 = vld [vmem:[%s4 + $0x8] sm:$0xff]
        %v570 = vld [vmem:[%s4 + $0x10] sm:$0xff]
        %v571 = vld [vmem:[%s4 + $0x18] sm:$0xff]
        %572 = vmatpush.msra.mxu0 0.0
        %573 = vmatpush.msra.mxu0 0.0
        %574 = vmatpush.msra.mxu0 0.0
        %575 = vmatpush.msra.mxu0 0.0
        %576 = vmatpush.msra.mxu0 0.0
        %577 = vmatpush.msra.mxu0 0.0
        %578 = vmatpush.msra.mxu0 0.0
        %579 = vmatpush.msra.mxu0 0.0
        %580 = vmatpush.msra.mxu0 0.0
        %581 = vmatpush.msra.mxu0 0.0
        %582 = vmatpush.msra.mxu0 0.0
        %583 = vmatpush.msra.mxu0 0.0
        %584 = vmatpush.msra.mxu0 %v571
        %585 = vmatpush.msra.mxu0 %v570
        %586 = vmatpush.msra.mxu0 %v569
        %587 = vmatpush.msra.mxu0 %v568
        %588 = vmatmul.f32.gmra.mxu0 %v546
        %v589 = vpop.f32.mrf.mxu0
        %v590 = vadd.f32 0.0, %v589
        %591 = vdwg.mxu0
        %v592 = vld [vmem:[%s5] sm:$0xff]
        %v593 = vld [vmem:[%s5 + $0x8] sm:$0xff]
        %v594 = vld [vmem:[%s5 + $0x10] sm:$0xff]
        %v595 = vld [vmem:[%s5 + $0x18] sm:$0xff]
        %596 = vmatpush.msra.mxu0 0.0
        %597 = vmatpush.msra.mxu0 0.0
        %598 = vmatpush.msra.mxu0 0.0
        %599 = vmatpush.msra.mxu0 0.0
        %600 = vmatpush.msra.mxu0 0.0
        %601 = vmatpush.msra.mxu0 0.0
        %602 = vmatpush.msra.mxu0 0.0
        %603 = vmatpush.msra.mxu0 0.0
        %604 = vmatpush.msra.mxu0 0.0
        %605 = vmatpush.msra.mxu0 0.0
        %606 = vmatpush.msra.mxu0 0.0
        %607 = vmatpush.msra.mxu0 0.0
        %608 = vmatpush.msra.mxu0 %v595
        %609 = vmatpush.msra.mxu0 %v594
        %610 = vmatpush.msra.mxu0 %v593
        %611 = vmatpush.msra.mxu0 %v592
        %612 = vmatmul.f32.gmra.mxu0 %v546
        %v613 = vpop.f32.mrf.mxu0
        %v614 = vadd.f32 0.0, %v613
        %615 = vdwg.mxu0
        %617 = vrot.lane.b32.xlu0 %v566, 120
        %v618 = vpop.permute.xlu0 %617
        %619 = vrot.lane.b32.xlu0 %v566, 112
        %v620 = vpop.permute.xlu0 %619
        %621 = vrot.lane.b32.xlu0 %v566, 104
        %v622 = vpop.permute.xlu0 %621
        %624 = vrot.lane.b32.xlu0 %v590, 120
        %v625 = vpop.permute.xlu0 %624
        %626 = vrot.lane.b32.xlu0 %v590, 112
        %v627 = vpop.permute.xlu0 %626
        %628 = vrot.lane.b32.xlu0 %v590, 104
        %v629 = vpop.permute.xlu0 %628
        %631 = vrot.lane.b32.xlu0 %v614, 120
        %v632 = vpop.permute.xlu0 %631
        %634 = vrot.lane.b32.xlu0 %v614, 112
        %v635 = vpop.permute.xlu0 %634
        %637 = vrot.lane.b32.xlu0 %v614, 104
        %v638 = vpop.permute.xlu0 %637
        %vm640 = vcmask 64512
        %v641 = vsel %vm640, %v566, 0
        %v643 = vsel %vm640, %v590, 0
        %645 = vmatpush.xpose.msra.mxu0 0.0
        %646 = vmatpush.xpose.msra.mxu0 0.0
        %647 = vmatpush.xpose.msra.mxu0 0.0
        %648 = vmatpush.xpose.msra.mxu0 0.0
        %649 = vmatpush.xpose.msra.mxu0 0.0
        %650 = vmatpush.xpose.msra.mxu0 0.0
        %651 = vmatpush.xpose.msra.mxu0 0.0
        %652 = vmatpush.xpose.msra.mxu0 0.0
        %653 = vmatpush.xpose.msra.mxu0 0.0
        %654 = vmatpush.xpose.msra.mxu0 0.0
        %655 = vmatpush.xpose.msra.mxu0 0.0
        %656 = vmatpush.xpose.msra.mxu0 0.0
        %657 = vmatpush.xpose.msra.mxu0 0.0
        %658 = vmatpush.xpose.msra.mxu0 0.0
        %659 = vmatpush.xpose.msra.mxu0 0.0
        %660 = vmatpush.xpose.msra.mxu0 %v643
        %661 = vmatmul.f32.gmra.mxu0 %v641
        %v662 = vpop.f32.mrf.mxu0
        %v663 = vadd.f32 0.0, %v662
        %664 = vdwg.mxu0
        %v665 = vsel %vm640, %v618, 0
        %v667 = vsel %vm640, %v625, 0
        %669 = vmatpush.xpose.msra.mxu0 0.0
        %670 = vmatpush.xpose.msra.mxu0 0.0
        %671 = vmatpush.xpose.msra.mxu0 0.0
        %672 = vmatpush.xpose.msra.mxu0 0.0
        %673 = vmatpush.xpose.msra.mxu0 0.0
        %674 = vmatpush.xpose.msra.mxu0 0.0
        %675 = vmatpush.xpose.msra.mxu0 0.0
        %676 = vmatpush.xpose.msra.mxu0 0.0
        %677 = vmatpush.xpose.msra.mxu0 0.0
        %678 = vmatpush.xpose.msra.mxu0 0.0
        %679 = vmatpush.xpose.msra.mxu0 0.0
        %680 = vmatpush.xpose.msra.mxu0 0.0
        %681 = vmatpush.xpose.msra.mxu0 0.0
        %682 = vmatpush.xpose.msra.mxu0 0.0
        %683 = vmatpush.xpose.msra.mxu0 0.0
        %684 = vmatpush.xpose.msra.mxu0 %v667
        %685 = vmatmul.f32.gmra.mxu0 %v665
        %v686 = vpop.f32.mrf.mxu0
        %v687 = vadd.f32 0.0, %v686
        %688 = vdwg.mxu0
        %v689 = vsel %vm640, %v620, 0
        %v691 = vsel %vm640, %v627, 0
        %693 = vmatpush.xpose.msra.mxu0 0.0
        %694 = vmatpush.xpose.msra.mxu0 0.0
        %695 = vmatpush.xpose.msra.mxu0 0.0
        %696 = vmatpush.xpose.msra.mxu0 0.0
        %697 = vmatpush.xpose.msra.mxu0 0.0
        %698 = vmatpush.xpose.msra.mxu0 0.0
        %699 = vmatpush.xpose.msra.mxu0 0.0
        %700 = vmatpush.xpose.msra.mxu0 0.0
        %701 = vmatpush.xpose.msra.mxu0 0.0
        %702 = vmatpush.xpose.msra.mxu0 0.0
        %703 = vmatpush.xpose.msra.mxu0 0.0
        %704 = vmatpush.xpose.msra.mxu0 0.0
        %705 = vmatpush.xpose.msra.mxu0 0.0
        %706 = vmatpush.xpose.msra.mxu0 0.0
        %707 = vmatpush.xpose.msra.mxu0 0.0
        %708 = vmatpush.xpose.msra.mxu0 %v691
        %709 = vmatmul.f32.gmra.mxu0 %v689
        %v710 = vpop.f32.mrf.mxu0
        %v711 = vadd.f32 0.0, %v710
        %712 = vdwg.mxu0
        %v713 = vsel %vm640, %v622, 0
        %v715 = vsel %vm640, %v629, 0
        %717 = vmatpush.xpose.msra.mxu0 0.0
        %718 = vmatpush.xpose.msra.mxu0 0.0
        %719 = vmatpush.xpose.msra.mxu0 0.0
        %720 = vmatpush.xpose.msra.mxu0 0.0
        %721 = vmatpush.xpose.msra.mxu0 0.0
        %722 = vmatpush.xpose.msra.mxu0 0.0
        %723 = vmatpush.xpose.msra.mxu0 0.0
        %724 = vmatpush.xpose.msra.mxu0 0.0
        %725 = vmatpush.xpose.msra.mxu0 0.0
        %726 = vmatpush.xpose.msra.mxu0 0.0
        %727 = vmatpush.xpose.msra.mxu0 0.0
        %728 = vmatpush.xpose.msra.mxu0 0.0
        %729 = vmatpush.xpose.msra.mxu0 0.0
        %730 = vmatpush.xpose.msra.mxu0 0.0
        %731 = vmatpush.xpose.msra.mxu0 0.0
        %732 = vmatpush.xpose.msra.mxu0 %v715
        %733 = vmatmul.f32.gmra.mxu0 %v713
        %v734 = vpop.f32.mrf.mxu0
        %v735 = vadd.f32 0.0, %v734
        %736 = vdwg.mxu0
        %v737 = vsel %vm640, %v663, -inf
        %738 = vmax.xlane.f32.xlu0 %v737
        %v739 = vpop.xlane.xlu0 %738
        %v740 = vsel %vm640, %v687, -inf
        %741 = vmax.xlane.f32.xlu0 %v740
        %v742 = vpop.xlane.xlu0 %741
        %v743 = vsel %vm640, %v711, -inf
        %744 = vmax.xlane.f32.xlu0 %v743
        %v745 = vpop.xlane.xlu0 %744
        %v746 = vsel %vm640, %v735, -inf
        %747 = vmax.xlane.f32.xlu0 %v746
        %v748 = vpop.xlane.xlu0 %747
        %v749 = vsub.f32 %v663, %v739
        %v750 = vsub.f32 %v687, %v742
        %v751 = vsub.f32 %v711, %v745
        %v752 = vsub.f32 %v735, %v748
        %v753 = vmul.f32 %v749, 1.442695
        %v754 = vpow.pop %v753
        %v755 = vmul.f32 %v750, 1.442695
        %v756 = vpow.pop %v755
        %v757 = vmul.f32 %v751, 1.442695
        %v758 = vpow.pop %v757
        %v759 = vmul.f32 %v752, 1.442695
        %v760 = vpow.pop %v759
        %v761 = vsel %vm640, %v754, 0.0
        %762 = vadd.xlane.f32.xlu0 %v761
        %v763 = vpop.xlane.xlu0 %762
        %v764 = vsel %vm640, %v756, 0.0
        %765 = vadd.xlane.f32.xlu0 %v764
        %v766 = vpop.xlane.xlu0 %765
        %v767 = vsel %vm640, %v758, 0.0
        %768 = vadd.xlane.f32.xlu0 %v767
        %v769 = vpop.xlane.xlu0 %768
        %v770 = vsel %vm640, %v760, 0.0
        %771 = vadd.xlane.f32.xlu0 %v770
        %v772 = vpop.xlane.xlu0 %771
        %v773 = vrcp.pop %v763
        %v774 = vrcp.pop %v766
        %v775 = vrcp.pop %v769
        %v776 = vrcp.pop %v772
        %v777 = vmul.f32 %v754, %v773
        %v778 = vmul.f32 %v756, %v774
        %v779 = vmul.f32 %v758, %v775
        %v780 = vmul.f32 %v760, %v776
        %v782 = vsel %vm640, %v777, 0
        %784 = vmatpush.msra.mxu0 0.0
        %785 = vmatpush.msra.mxu0 0.0
        %786 = vmatpush.msra.mxu0 0.0
        %787 = vmatpush.msra.mxu0 0.0
        %788 = vmatpush.msra.mxu0 0.0
        %789 = vmatpush.msra.mxu0 0.0
        %790 = vmatpush.msra.mxu0 0.0
        %791 = vmatpush.msra.mxu0 0.0
        %792 = vmatpush.msra.mxu0 0.0
        %793 = vmatpush.msra.mxu0 0.0
        %794 = vmatpush.msra.mxu0 0.0
        %795 = vmatpush.msra.mxu0 0.0
        %796 = vmatpush.msra.mxu0 0.0
        %797 = vmatpush.msra.mxu0 0.0
        %798 = vmatpush.msra.mxu0 0.0
        %799 = vmatpush.msra.mxu0 %v614
        %800 = vmatmul.f32.gmra.mxu0 %v782
        %v801 = vpop.f32.mrf.mxu0
        %v802 = vadd.f32 0.0, %v801
        %803 = vdwg.mxu0
        %v805 = vsel %vm640, %v778, 0
        %807 = vmatpush.msra.mxu0 0.0
        %808 = vmatpush.msra.mxu0 0.0
        %809 = vmatpush.msra.mxu0 0.0
        %810 = vmatpush.msra.mxu0 0.0
        %811 = vmatpush.msra.mxu0 0.0
        %812 = vmatpush.msra.mxu0 0.0
        %813 = vmatpush.msra.mxu0 0.0
        %814 = vmatpush.msra.mxu0 0.0
        %815 = vmatpush.msra.mxu0 0.0
        %816 = vmatpush.msra.mxu0 0.0
        %817 = vmatpush.msra.mxu0 0.0
        %818 = vmatpush.msra.mxu0 0.0
        %819 = vmatpush.msra.mxu0 0.0
        %820 = vmatpush.msra.mxu0 0.0
        %821 = vmatpush.msra.mxu0 0.0
        %822 = vmatpush.msra.mxu0 %v632
        %823 = vmatmul.f32.gmra.mxu0 %v805
        %v824 = vpop.f32.mrf.mxu0
        %v825 = vadd.f32 0.0, %v824
        %826 = vdwg.mxu0
        %v828 = vsel %vm640, %v779, 0
        %830 = vmatpush.msra.mxu0 0.0
        %831 = vmatpush.msra.mxu0 0.0
        %832 = vmatpush.msra.mxu0 0.0
        %833 = vmatpush.msra.mxu0 0.0
        %834 = vmatpush.msra.mxu0 0.0
        %835 = vmatpush.msra.mxu0 0.0
        %836 = vmatpush.msra.mxu0 0.0
        %837 = vmatpush.msra.mxu0 0.0
        %838 = vmatpush.msra.mxu0 0.0
        %839 = vmatpush.msra.mxu0 0.0
        %840 = vmatpush.msra.mxu0 0.0
        %841 = vmatpush.msra.mxu0 0.0
        %842 = vmatpush.msra.mxu0 0.0
        %843 = vmatpush.msra.mxu0 0.0
        %844 = vmatpush.msra.mxu0 0.0
        %845 = vmatpush.msra.mxu0 %v635
        %846 = vmatmul.f32.gmra.mxu0 %v828
        %v847 = vpop.f32.mrf.mxu0
        %v848 = vadd.f32 0.0, %v847
        %849 = vdwg.mxu0
        %v851 = vsel %vm640, %v780, 0
        %853 = vmatpush.msra.mxu0 0.0
        %854 = vmatpush.msra.mxu0 0.0
        %855 = vmatpush.msra.mxu0 0.0
        %856 = vmatpush.msra.mxu0 0.0
        %857 = vmatpush.msra.mxu0 0.0
        %858 = vmatpush.msra.mxu0 0.0
        %859 = vmatpush.msra.mxu0 0.0
        %860 = vmatpush.msra.mxu0 0.0
        %861 = vmatpush.msra.mxu0 0.0
        %862 = vmatpush.msra.mxu0 0.0
        %863 = vmatpush.msra.mxu0 0.0
        %864 = vmatpush.msra.mxu0 0.0
        %865 = vmatpush.msra.mxu0 0.0
        %866 = vmatpush.msra.mxu0 0.0
        %867 = vmatpush.msra.mxu0 0.0
        %868 = vmatpush.msra.mxu0 %v638
        %869 = vmatmul.f32.gmra.mxu0 %v851
        %v870 = vpop.f32.mrf.mxu0
        %v871 = vadd.f32 0.0, %v870
        %872 = vdwg.mxu0
        %874 = vrot.lane.b32.xlu0 %v825, 8
        %v875 = vpop.permute.xlu0 %874
        %878 = vrot.lane.b32.xlu0 %v848, 16
        %v879 = vpop.permute.xlu0 %878
        %882 = vrot.lane.b32.xlu0 %v871, 24
        %v883 = vpop.permute.xlu0 %882
        %v885 = vsel %vm640, %v802, %v875
        %vm886 = vcmask 130048
        %v887 = vsel %vm886, %v885, %v879
        %vm888 = vcmask 195584
        %v889 = vsel %vm888, %v887, %v883
        %v890 = vld [vmem:[%s6] sm:$0xff]
        %v891 = vld [vmem:[%s6 + $0x8] sm:$0xff]
        %v892 = vld [vmem:[%s6 + $0x10] sm:$0xff]
        %v893 = vld [vmem:[%s6 + $0x18] sm:$0xff]
        %v895 = vsel %vm503, %v889, 0
        %897 = vmatpush.msra.mxu0 0.0
        %898 = vmatpush.msra.mxu0 0.0
        %899 = vmatpush.msra.mxu0 0.0
        %900 = vmatpush.msra.mxu0 0.0
        %901 = vmatpush.msra.mxu0 0.0
        %902 = vmatpush.msra.mxu0 0.0
        %903 = vmatpush.msra.mxu0 0.0
        %904 = vmatpush.msra.mxu0 0.0
        %905 = vmatpush.msra.mxu0 0.0
        %906 = vmatpush.msra.mxu0 0.0
        %907 = vmatpush.msra.mxu0 0.0
        %908 = vmatpush.msra.mxu0 0.0
        %909 = vmatpush.msra.mxu0 %v893
        %910 = vmatpush.msra.mxu0 %v892
        %911 = vmatpush.msra.mxu0 %v891
        %912 = vmatpush.msra.mxu0 %v890
        %913 = vmatmul.f32.gmra.mxu0 %v895
        %v914 = vpop.f32.mrf.mxu0
        %v915 = vadd.f32 0.0, %v914
        %916 = vdwg.mxu0
        %v917 = vadd.f32 %v500, %v915
        %v918 = vld [vmem:[%s7] sm:$0x1]
        %v920 = vperm.slane %v918, 0
        %v922 = vadd.f32 %v917, %v920
        %v923 = vld [vmem:[%s8] sm:$0x1]
        %v924 = vld [vmem:[%s9] sm:$0x1]
        %v925 = vsel %vm503, %v922, 0.0
        %926 = vadd.xlane.f32.xlu0 %v925
        %v927 = vpop.xlane.xlu0 %926
        %v928 = vmul.f32 %v927, %v513
        %v929 = vsub.f32 %v922, %v928
        %v930 = vmul.f32 %v929, %v929
        %v931 = vsel %vm503, %v930, 0.0
        %932 = vadd.xlane.f32.xlu0 %v931
        %v933 = vpop.xlane.xlu0 %932
        %v934 = vmul.f32 %v933, %v513
        %v935 = vadd.f32 %v934, 1e-05
        %v936 = vrsqrt.pop %v935
        %v937 = vmul.f32 %v936, %v935
        %v938 = vmul.f32 %v937, %v936
        %v939 = vmul.f32 0.5, %v938
        %v940 = vsub.f32 1.5, %v939
        %v941 = vmul.f32 %v936, %v940
        %vm942 = vweird.f32 %v935
        %vm943 = vweird.f32 %v936
        %vm944 = vmor %vm942, %vm943
        %v945 = vsel %vm944, %v936, %v941
        %v946 = vmul.f32 %v929, %v945
        %v948 = vperm.slane %v923, 0
        %v950 = vmul.f32 %v946, %v948
        %v952 = vperm.slane %v924, 0
        %v954 = vadd.f32 %v950, %v952
        %v955 = vld [vmem:[%s10] sm:$0xff]
        %v956 = vld [vmem:[%s10 + $0x8] sm:$0xff]
        %v957 = vld [vmem:[%s10 + $0x10] sm:$0xff]
        %v958 = vld [vmem:[%s10 + $0x18] sm:$0xff]
        %v959 = vld [vmem:[%s11] sm:$0x1]
        %v961 = vperm.slane %v959, 0
        %v964 = vsel %vm503, %v954, 0
        %966 = vmatpush.msra.mxu0 0.0
        %967 = vmatpush.msra.mxu0 0.0
        %968 = vmatpush.msra.mxu0 0.0
        %969 = vmatpush.msra.mxu0 0.0
        %970 = vmatpush.msra.mxu0 0.0
        %971 = vmatpush.msra.mxu0 0.0
        %972 = vmatpush.msra.mxu0 0.0
        %973 = vmatpush.msra.mxu0 0.0
        %974 = vmatpush.msra.mxu0 0.0
        %975 = vmatpush.msra.mxu0 0.0
        %976 = vmatpush.msra.mxu0 0.0
        %977 = vmatpush.msra.mxu0 0.0
        %978 = vmatpush.msra.mxu0 %v958
        %979 = vmatpush.msra.mxu0 %v957
        %980 = vmatpush.msra.mxu0 %v956
        %981 = vmatpush.msra.mxu0 %v955
        %982 = vmatmul.f32.gmra.mxu0 %v964
        %v983 = vpop.f32.mrf.mxu0
        %v984 = vadd.f32 %v961, %v983
        %985 = vdwg.mxu0
        %v986 = vmul.f32 %v984, 0.5
        %v987 = vmul.f32 %v984, 0.70710677
        %v988 = vmul.f32 %v987, %v987
        %v989 = vmin.f32 16.0, %v988
        %v990 = vmul.f32 %v989, 2.1237322e-06
        %v991 = vadd.f32 %v990, 0.00028619796
        %v992 = vmul.f32 %v989, %v991
        %v993 = vadd.f32 %v992, 0.0036580483
        %v994 = vmul.f32 %v989, %v993
        %v995 = vadd.f32 %v994, 0.05243302
        %v996 = vmul.f32 %v989, %v995
        %v997 = vadd.f32 %v996, 0.18741608
        %v998 = vmul.f32 %v989, %v997
        %v999 = vadd.f32 %v998, 1.1283791
        %v1000 = vmul.f32 %v987, %v999
        %v1001 = vmul.f32 %v989, 3.8918573e-05
        %v1002 = vadd.f32 %v1001, 0.001143296
        %v1003 = vmul.f32 %v989, %v1002
        %v1004 = vadd.f32 %v1003, 0.014752088
        %v1005 = vmul.f32 %v989, %v1004
        %v1006 = vadd.f32 %v1005, 0.112945676
        %v1007 = vmul.f32 %v989, %v1006
        %v1008 = vadd.f32 %v1007, 0.4994258
        %v1009 = vmul.f32 %v989, %v1008
        %v1010 = vadd.f32 %v1009, 1.0
        %v1011 = vrcp.pop %v1010
        %v1012 = vmul.f32 %v1010, %v1011
        %v1013 = vsub.f32 1.0, %v1012
        %v1014 = vmul.f32 %v1011, %v1013
        %v1015 = vadd.f32 %v1011, %v1014
        %vm1016 = vweird.f32 %v1010
        %vm1017 = vweird.f32 %v1011
        %vm1018 = vmor %vm1016, %vm1017
        %v1019 = vsel %vm1018, %v1011, %v1015
        %v1020 = vand.u32 2147483647, %v1010
        %vm1021 = vcmp.eq.f32.partialorder %v1020, 8.507059e+37
        %v1022 = vand.u32 %v1010, 2147483648
        %v1023 = vor.u32 1.1754944e-38, %v1022
        %v1024 = vsel %vm1021, %v1023, %v1019
        %v1025 = vmul.f32 %v1000, %v1024
        %v1026 = vmin.f32 %v1025, 1.0
        %v1027 = vmax.f32 %v1026, -1.0
        %v1028 = vadd.f32 %v1027, 1.0
        %v1029 = vmul.f32 %v986, %v1028
        %v1030 = vld [vmem:[%s12] sm:$0xff]
        %v1031 = vld [vmem:[%s12 + $0x8] sm:$0xff]
        %v1032 = vld [vmem:[%s12 + $0x10] sm:$0xff]
        %v1033 = vld [vmem:[%s12 + $0x18] sm:$0xff]
        %v1034 = vld [vmem:[%s12 + $0x20] sm:$0xff]
        %v1035 = vld [vmem:[%s12 + $0x28] sm:$0xff]
        %v1036 = vld [vmem:[%s12 + $0x30] sm:$0xff]
        %v1037 = vld [vmem:[%s12 + $0x38] sm:$0xff]
        %v1038 = vld [vmem:[%s12 + $0x40] sm:$0xff]
        %v1039 = vld [vmem:[%s12 + $0x48] sm:$0xff]
        %v1040 = vld [vmem:[%s12 + $0x50] sm:$0xff]
        %v1041 = vld [vmem:[%s12 + $0x58] sm:$0xff]
        %v1042 = vld [vmem:[%s12 + $0x60] sm:$0xff]
        %v1043 = vld [vmem:[%s12 + $0x68] sm:$0xff]
        %v1044 = vld [vmem:[%s12 + $0x70] sm:$0xff]
        %v1045 = vld [vmem:[%s12 + $0x78] sm:$0xff]
        %v1046 = vld [vmem:[%s13] sm:$0x1]
        %v1048 = vperm.slane %v1046, 0
        %1050 = vmatpush.msra.mxu0 %v1045
        %1051 = vmatpush.msra.mxu0 %v1044
        %1052 = vmatpush.msra.mxu0 %v1043
        %1053 = vmatpush.msra.mxu0 %v1042
        %1054 = vmatpush.msra.mxu0 %v1041
        %1055 = vmatpush.msra.mxu0 %v1040
        %1056 = vmatpush.msra.mxu0 %v1039
        %1057 = vmatpush.msra.mxu0 %v1038
        %1058 = vmatpush.msra.mxu0 %v1037
        %1059 = vmatpush.msra.mxu0 %v1036
        %1060 = vmatpush.msra.mxu0 %v1035
        %1061 = vmatpush.msra.mxu0 %v1034
        %1062 = vmatpush.msra.mxu0 %v1033
        %1063 = vmatpush.msra.mxu0 %v1032
        %1064 = vmatpush.msra.mxu0 %v1031
        %1065 = vmatpush.msra.mxu0 %v1030
        %1066 = vmatmul.f32.gmra.mxu0 %v1029
        %v1067 = vpop.f32.mrf.mxu0
        %v1068 = vadd.f32 %v1048, %v1067
        %1069 = vdwg.mxu0
        %v1070 = vadd.f32 %v922, %v1068
        %1071 = vst.msk [vmem:[%s499] sm:$0xff] %vm503, %v1070
        %s1072 = sand.u32 %s339, 1
        %s1073 = scalar_lea.sflag [#allocation4], %s1072
        %s1074 = sand.u32 %s339, 1
        %s1075 = smul.addr %s1074, 8
        %s1076 = scalar_lea.vmem [#allocation7], %s1075
        // Predicated region
        $region85: #{tpu_custom_call.1} parent=75 // pred_check
          %p1077 = pneg %p349
        $region86: #{tpu_custom_call.1} parent=75 // pred_check_branch
          %1079 = sbr.rel (%p1077) target = $region88
        $region87: #{tpu_custom_call.1} parent=75 // pred_region
          %1081 = vsyncadd %s1073, 0
          %s1082 = smul.addr %s32, 8
          %s1083 = scalar_lea.hbm %s14, %s1082
          %s1085 = sshll.u32 %s1076, 4
          %s1086 = int_to_ptr.vmem [resolvable:$true] %s1085
          %s1087 = sshll.u32 %s1083, 4
          %s1088 = int_to_ptr.hbm [resolvable:$true] %s1087
          %1090 = dma.vmem_to_hbm [thread:$0]  %s1086, 128, %s1088, %s1073
        $region88: #{tpu_custom_call.1} parent=75 // pred_fallthru
          _
      $region76: #{tpu_custom_call.1} parent=5 // pred_fallthru
        _
      %p1091 = scmp.le.s32.totalorder 2, %s27
      // Predicated region
      $region89: #{tpu_custom_call.1} parent=5 // pred_check
        %p1092 = pneg %p1091
      $region90: #{tpu_custom_call.1} parent=5 // pred_check_branch
        %1094 = sbr.rel (%p1092) target = $region92
      $region91: #{tpu_custom_call.1} parent=5 // pred_region
        %s1095 = ssub.s32 %s27, 2
        // Predicated region
        $region93: #{tpu_custom_call.1} parent=91 // pred_check
          %p1096 = pneg %p355
        $region94: #{tpu_custom_call.1} parent=91 // pred_check_branch
          %1098 = sbr.rel (%p1096) target = $region96
        $region95: #{tpu_custom_call.1} parent=91 // pred_region
          %s1099 = sand.u32 %s340, 1
          %s1100 = scalar_lea.sflag [#allocation4], %s1099
          %s1101 = sand.u32 %s340, 1
          %s1102 = smul.addr %s1101, 8
          %s1103 = scalar_lea.vmem [#allocation7], %s1102
          %1105 = dma.done %s1100, 128
        $region96: #{tpu_custom_call.1} parent=91 // pred_fallthru
          _
      $region92: #{tpu_custom_call.1} parent=5 // pred_fallthru
        _
    $region6: #{tpu_custom_call.1} parent=1 // loop_footer
      %s31 = sadd.s32 1, %s27
    $region7: #{tpu_custom_call.1} parent=1 // loop_footer_branch
      %26 = sbr.rel target = $region3
    $region8: #{tpu_custom_call.1} parent=1 // loop_exit
      _
    %1106 = vsyncpa [#allocation3], 1
    %s1107 = scalar_lea.sflag [#allocation3], 1
    %1108 = vsyncpa %s1107, 1
    %1109 = vsyncpa [#allocation6], 1
    %1110 = vsyncpa [#allocation4], 1
    %s1111 = scalar_lea.sflag [#allocation4], 1
    %1112 = vsyncpa %s1111, 1

</llo_original>
